<compile_context>
chip_gen: v5e
topology: v5e:2x2
jax: 0.10.0
libtpu: 0.0.40
codegen_flags: <defaults>
</compile_context>

<pallas_src>
import jax
import jax.numpy as jnp
import numpy as np
from jax.experimental import pallas as pl
from jax.experimental.pallas import tpu as pltpu


V_TILE = 512   # lane-dense vocab tile (multiple of 128).  Sweep 512/1024/2048 for
               # real vocab sizes; the demo vocab (500) pads to exactly one tile.


def _vmem_limit_bytes():
    """Generation-dependent VMEM budget: ~100 MiB on v5e/v6e, ~52 MiB cap on v7x."""
    try:
        cap = int(pltpu.get_tpu_info().vmem_capacity_bytes)
    except Exception:
        cap = 128 * 1024 * 1024
    if cap <= 64 * 1024 * 1024:          # v7x: 64 MiB per TC -> leave compiler headroom
        return 52 * 1024 * 1024
    return 100 * 1024 * 1024             # v5e/v6e: 128 MiB physical


_VMEM_LIMIT = _vmem_limit_bytes()


# --------------------------------------------------------------------------
# Single fused kernel: GRU cell + attention + context on the first grid step,
# bf16 output projection streamed over vocab tiles with an online logsumexp,
# log-softmax finalized in place on the last grid step.
# --------------------------------------------------------------------------
def attention_decoder_kernel(
    # inputs
    emb_ref,      # (B, E)   bf16   embedded input word (dropout = eval identity)
    ctx_ref,      # (B, H)   f32    previous decoder context (aliased to ctx output)
    h0_ref,       # (B, H)   f32    previous hidden state   (aliased to hid output)
    enc_ref,      # (B, S, H) f32   encoder outputs (transposed once per sequence)
    wie_ref,      # (E, 3H)  bf16   GRU input weights, embedded half, gates [r|z|n]
    wic_ref,      # (H, 3H)  bf16   GRU input weights, context half
    bih_ref,      # (1, 3H)  f32
    whh_ref,      # (H, 3H)  bf16   GRU hidden weights
    bhh_ref,      # (1, 3H)  f32
    wa_ref,       # (H, H)   bf16   attention Linear weight (used as h @ W)
    ba_ref,       # (1, H)   f32    attention Linear bias
    woh_ref,      # (H, TV)  bf16   output-projection tile (rnn-output half), streamed
    woc_ref,      # (H, TV)  bf16   output-projection tile (context half), streamed
    bo_ref,       # (1, TV)  f32    output bias tile (padded vocab columns = -1e30)
    # outputs
    out_ref,      # (B, Vp)  f32    log-probs over the padded vocab (VMEM resident)
    ctx_out_ref,  # (B, H)   f32    new context
    hid_out_ref,  # (B, H)   f32    new hidden state
    attn_ref,     # (B, S)   f32    attention weights
    # scratch
    h_s,          # (B, H) bf16     rnn output as matmul operand
    c_s,          # (B, H) bf16     new context as matmul operand
    m_s,          # (B, 1) f32      running max of logits
    l_s,          # (B, 1) f32      running sum(exp(logits - m))
):
    j = pl.program_id(0)
    nv = pl.num_programs(0)
    H = h0_ref.shape[-1]
    tv = woh_ref.shape[-1]

    # ---- GRU cell + attention: computed once, on the first vocab tile ----
    @pl.when(j == 0)
    def _prologue():
        emb = emb_ref[...]                            # bf16
        ctx_f32 = ctx_ref[...]
        h0_f32 = h0_ref[...]
        ctx_b = ctx_f32.astype(jnp.bfloat16)
        h0_b = h0_f32.astype(jnp.bfloat16)

        # Fused GRU cell (no concat): two accumulating bf16 MXU pushes for gi.
        gi = (jnp.dot(emb, wie_ref[...], preferred_element_type=jnp.float32)
              + jnp.dot(ctx_b, wic_ref[...], preferred_element_type=jnp.float32)
              + bih_ref[...])
        gh = jnp.dot(h0_b, whh_ref[...], preferred_element_type=jnp.float32) + bhh_ref[...]
        r = jax.nn.sigmoid(gi[:, :H] + gh[:, :H])
        z = jax.nn.sigmoid(gi[:, H:2 * H] + gh[:, H:2 * H])
        n = jnp.tanh(gi[:, 2 * H:] + r * gh[:, 2 * H:])
        h = (1.0 - z) * n + z * h0_f32                                       # (B, H) f32

        # Luong "general" attention: score(h, e_s) = h^T (W_a e_s + b_a).
        # B and S are small -> VPU multiply + XLU reduce (no M=1 MXU matmuls).
        enc = enc_ref[...]                                                   # (B, S, H)
        hW = jnp.dot(h.astype(jnp.bfloat16), wa_ref[...],
                     preferred_element_type=jnp.float32)                     # (B, H)
        hb = jnp.sum(h * ba_ref[...], axis=-1, keepdims=True)                # (B, 1)
        energies = jnp.sum(hW[:, None, :] * enc, axis=-1) + hb               # (B, S)
        em = jnp.max(energies, axis=-1, keepdims=True)
        e = jnp.exp(energies - em)
        attn = e * pl.reciprocal(jnp.sum(e, axis=-1, keepdims=True), approx=True)
        ctx_new = jnp.sum(attn[:, :, None] * enc, axis=1)                    # (B, H)

        h_s[...] = h.astype(h_s.dtype)
        c_s[...] = ctx_new.astype(c_s.dtype)
        m_s[...] = jnp.full(m_s.shape, -1e30, dtype=m_s.dtype)
        l_s[...] = jnp.zeros_like(l_s)
        hid_out_ref[...] = h
        ctx_out_ref[...] = ctx_new
        attn_ref[...] = attn

    # ---- streamed output projection for vocab tile j (bf16 weights, f32 acc) ----
    logits = (jnp.dot(h_s[...], woh_ref[...], preferred_element_type=jnp.float32)
              + jnp.dot(c_s[...], woc_ref[...], preferred_element_type=jnp.float32)
              + bo_ref[...])                                                 # (B, TV)
    start = pl.multiple_of(j * tv, tv)
    out_ref[:, pl.ds(start, tv)] = logits

    # ---- online logsumexp across vocab tiles ----
    m_prev = m_s[...]
    m_new = jnp.maximum(m_prev, jnp.max(logits, axis=-1, keepdims=True))
    l_s[...] = (l_s[...] * jnp.exp(m_prev - m_new)
                + jnp.sum(jnp.exp(logits - m_new), axis=-1, keepdims=True))
    m_s[...] = m_new

    # ---- fused log-softmax finalize on the last tile (output is VMEM resident) ----
    @pl.when(j == nv - 1)
    def _finalize():
        lse = m_s[...] + jnp.log(l_s[...])
        out_ref[...] = out_ref[...] - lse


# --------------------------------------------------------------------------
# Parameters (PyTorch shape conventions) and one-time repacking
# --------------------------------------------------------------------------
def init_params(key, tgt_vocab_size, embedding_size, hidden_size):
    ks = jax.random.split(key, 9)
    u = lambda k, shape: jax.random.uniform(k, shape, jnp.float32, -0.1, 0.1)
    return dict(
        embedding=u(ks[0], (tgt_vocab_size, embedding_size)),
        w_ih=u(ks[1], (3 * hidden_size, embedding_size + hidden_size)),   # GRU weight_ih_l0
        b_ih=u(ks[2], (3 * hidden_size,)),
        w_hh=u(ks[3], (3 * hidden_size, hidden_size)),                    # GRU weight_hh_l0
        b_hh=u(ks[4], (3 * hidden_size,)),
        w_attn=u(ks[5], (hidden_size, hidden_size)),                      # attention Linear
        b_attn=u(ks[6], (hidden_size,)),
        w_out=u(ks[7], (tgt_vocab_size, 2 * hidden_size)),                # out Linear
        b_out=u(ks[8], (tgt_vocab_size,)),
    )


def prepare_params(params, v_tile=V_TILE):
    """One-time weight repack (hoisted out of the per-decode-step path)."""
    H = params["w_hh"].shape[1]
    E = params["w_ih"].shape[1] - H
    V = params["w_out"].shape[0]
    v_pad = ((V + v_tile - 1) // v_tile) * v_tile
    pad = v_pad - V
    w_out = params["w_out"]
    # Output projection: split into [rnn-output | context] halves, transpose, pad the
    # vocab dim to a lane-dense multiple of the tile, and store in bf16 (f32 accum).
    woh = jnp.pad(w_out[:, :H].T, ((0, 0), (0, pad))).astype(jnp.bfloat16)   # (H, Vp)
    woc = jnp.pad(w_out[:, H:].T, ((0, 0), (0, pad))).astype(jnp.bfloat16)   # (H, Vp)
    # Padded vocab columns get a huge negative bias so they never affect the softmax.
    b_out = jnp.pad(params["b_out"], (0, pad), constant_values=-1e30).reshape(1, v_pad)
    w_ih_t = params["w_ih"].T                                                # (E+H, 3H)
    return dict(
        embedding=params["embedding"],
        w_ih_e=w_ih_t[:E].astype(jnp.bfloat16),          # (E, 3H), gates [r | z | n]
        w_ih_c=w_ih_t[E:].astype(jnp.bfloat16),          # (H, 3H)
        b_ih=params["b_ih"].reshape(1, -1),
        w_hh=params["w_hh"].T.astype(jnp.bfloat16),      # (H, 3H)
        b_hh=params["b_hh"].reshape(1, -1),
        w_attn=params["w_attn"].astype(jnp.bfloat16),    # (H, H)
        b_attn=params["b_attn"].reshape(1, -1),
        w_out_h=woh, w_out_c=woc, b_out=b_out,
    )


def prepare_encoder_outputs(encoder_outputs):
    """(S,B,H) -> (B,S,H).  Done ONCE per source sequence, not per decode step."""
    return jnp.transpose(encoder_outputs, (1, 0, 2))


def _const_spec(shape):
    return pl.BlockSpec(shape, lambda *_: (0,) * len(shape))


def _stream_spec(shape, nv):
    # Deeper buffering only pays off when there are enough tiles for the weight
    # stream to hide behind the GRU+attention prologue.
    if nv >= 3:
        return pl.BlockSpec(shape, lambda j: (0, j), pipeline_mode=pl.Buffered(3))
    return pl.BlockSpec(shape, lambda j: (0, j))


# --------------------------------------------------------------------------
# Forward wrapper
# --------------------------------------------------------------------------
@jax.jit
def attention_decoder_forward(prepared, input_tokens, decoder_context, hidden_state,
                              enc_bsh):
    emb_table = prepared["embedding"]
    V, E = emb_table.shape
    B, S, H = enc_bsh.shape
    v_pad = prepared["w_out_h"].shape[1]
    tv = min(V_TILE, v_pad)
    nv = v_pad // tv

    # input.view(1, -1) -> embedding lookup (gather kept in JAX glue); dropout = identity.
    tokens = input_tokens.reshape(-1)
    embedded = jnp.take(emb_table, tokens, axis=0).astype(jnp.bfloat16)  # (B, E) bf16
    ctx_in = decoder_context[0]                                          # (B, H)
    h0 = hidden_state[0]                                                 # (B, H)

    flops = 2 * B * (E * 3 * H + H * 3 * H + H * 3 * H + H * H + 2 * S * H
                     + 2 * H * v_pad)
    transcendentals = B * (3 * H + S + v_pad)
    bytes_accessed = (
        2 * B * E + 4 * (2 * B * H + B * S * H)                          # activations in
        + 2 * ((E + 2 * H) * 3 * H + H * H) + 4 * (7 * H)                # bf16 small weights
        + 2 * (2 * H * v_pad) + 4 * v_pad                                # bf16 out-proj + bias
        + 4 * (B * v_pad + 2 * B * H + B * S)                            # outputs
    )
    cost = pl.CostEstimate(flops=flops, transcendentals=transcendentals,
                           bytes_accessed=bytes_accessed)

    out_padded, context, hidden, attn = pl.pallas_call(
        attention_decoder_kernel,
        out_shape=(
            jax.ShapeDtypeStruct((B, v_pad), jnp.float32),   # log-probs (padded vocab)
            jax.ShapeDtypeStruct((B, H), jnp.float32),       # new context
            jax.ShapeDtypeStruct((B, H), jnp.float32),       # new hidden state
            jax.ShapeDtypeStruct((B, S), jnp.float32),       # attention weights
        ),
        grid=(nv,),
        in_specs=[
            _const_spec((B, E)),                             # embedded (bf16)
            _const_spec((B, H)),                             # previous context
            _const_spec((B, H)),                             # previous hidden
            _const_spec((B, S, H)),                          # encoder outputs
            _const_spec((E, 3 * H)),                         # GRU input weights (emb half)
            _const_spec((H, 3 * H)),                         # GRU input weights (ctx half)
            _const_spec((1, 3 * H)),
            _const_spec((H, 3 * H)),                         # GRU hidden weights
            _const_spec((1, 3 * H)),
            _const_spec((H, H)),                             # attention weight
            _const_spec((1, H)),                             # attention bias
            _stream_spec((H, tv), nv),                       # out-proj (rnn half), streamed
            _stream_spec((H, tv), nv),                       # out-proj (ctx half), streamed
            _stream_spec((1, tv), nv),                       # out bias tile
        ],
        out_specs=(
            _const_spec((B, v_pad)),                         # resident log-prob slab
            _const_spec((B, H)),
            _const_spec((B, H)),
            _const_spec((B, S)),
        ),
        scratch_shapes=[
            pltpu.VMEM((B, H), jnp.bfloat16),                # rnn output (matmul operand)
            pltpu.VMEM((B, H), jnp.bfloat16),                # context (matmul operand)
            pltpu.VMEM((B, 1), jnp.float32),                 # running max
            pltpu.VMEM((B, 1), jnp.float32),                 # running sum(exp)
        ],
        compiler_params=pltpu.CompilerParams(
            # online logsumexp + resident outputs force sequential vocab tiles.
            # TODO(synk): v7x dual-TC vocab split would need a partial-LSE merge.
            dimension_semantics=("arbitrary",),
            vmem_limit_bytes=_VMEM_LIMIT,
        ),
        cost_estimate=cost,
        input_output_aliases={1: 1, 2: 2},                   # ctx->context, h0->hidden
    )(embedded, ctx_in, h0, enc_bsh,
      prepared["w_ih_e"], prepared["w_ih_c"], prepared["b_ih"],
      prepared["w_hh"], prepared["b_hh"],
      prepared["w_attn"], prepared["b_attn"],
      prepared["w_out_h"], prepared["w_out_c"], prepared["b_out"])

    output = out_padded[:, :V]                               # drop vocab padding
    # Re-pack to the PyTorch module's return conventions.
    return (output,                 # (B, V)
            context[None, :, :],    # (1, B, H)
            hidden[None, :, :],     # (n_layers=1, B, H)
            attn[:, None, :])       # (B, 1, S)


# --------------------------------------------------------------------------
# Pure-JAX reference (mirrors the PyTorch forward, dropout = identity, f32)
# --------------------------------------------------------------------------
def reference_forward(params, input_tokens, decoder_context, hidden_state,
                      encoder_outputs):
    H = hidden_state.shape[-1]
    tokens = input_tokens.reshape(-1)
    embedded = params["embedding"][tokens]                               # (B, E)
    x = jnp.concatenate([embedded, decoder_context[0]], axis=-1)         # (B, E+H)
    h0 = hidden_state[0]
    gi = x @ params["w_ih"].T + params["b_ih"]
    gh = h0 @ params["w_hh"].T + params["b_hh"]
    r = jax.nn.sigmoid(gi[:, :H] + gh[:, :H])
    z = jax.nn.sigmoid(gi[:, H:2 * H] + gh[:, H:2 * H])
    n = jnp.tanh(gi[:, 2 * H:] + r * gh[:, 2 * H:])
    h = (1.0 - z) * n + z * h0
    enc = jnp.transpose(encoder_outputs, (1, 0, 2))                      # (B, S, H)
    proj = enc @ params["w_attn"].T + params["b_attn"]
    energies = jnp.einsum("bh,bsh->bs", h, proj)
    attn = jax.nn.softmax(energies, axis=-1)
    context = jnp.einsum("bs,bsh->bh", attn, enc)
    logits = jnp.concatenate([h, context], -1) @ params["w_out"].T + params["b_out"]
    output = jax.nn.log_softmax(logits, axis=-1)
    return output, context[None], h[None], attn[:, None, :]


# --------------------------------------------------------------------------
if __name__ == "__main__":
    V, E, H, S, B = 500, 128, 128, 16, 8   # tgt_vocab, embedding, hidden, seq, batch

    key = jax.random.PRNGKey(0)
    kp, k1, k2, k3, k4 = jax.random.split(key, 5)
    params = init_params(kp, V, E, H)
    prepared = prepare_params(params)                      # weight repack: once

    input_tokens = jax.random.randint(k1, (1, B), 0, V)    # last output words
    decoder_context = jax.random.normal(k2, (1, B, H), jnp.float32)
    hidden_state = jax.random.normal(k3, (1, B, H), jnp.float32)   # n_layers = 1
    encoder_outputs = jax.random.normal(k4, (S, B, H), jnp.float32)

    enc_bsh = prepare_encoder_outputs(encoder_outputs)     # transpose: once per sequence

    outs = attention_decoder_forward(prepared, input_tokens, decoder_context,
                                     hidden_state, enc_bsh)
    outs = jax.block_until_ready(outs)

    refs = reference_forward(params, input_tokens, decoder_context,
                             hidden_state, encoder_outputs)
    # Tolerances reflect bf16 weights (GRU/attention/output projection) and the
    # approximate EUP reciprocal in the attention softmax.
    tols = [(5e-2, 5e-2),   # output (log-probs)
            (3e-2, 3e-2),   # context
            (2e-2, 2e-2),   # hidden state
            (2e-2, 2e-2)]   # attention weights
    for o, r, (rt, at) in zip(outs, refs, tols):
        np.testing.assert_allclose(np.asarray(o), np.asarray(r), rtol=rt, atol=at)

    print("KERNEL_OK")
</pallas_src>

<mosaic_0001>
module attributes {stable_mosaic.version = 11 : i64} {
  func.func @attention_decoder_kernel(%arg0: i32, %arg1: memref<8x128xbf16, #tpu.memory_space<vmem>>, %arg2: memref<8x128xf32, #tpu.memory_space<vmem>>, %arg3: memref<8x128xf32, #tpu.memory_space<vmem>>, %arg4: memref<8x16x128xf32, #tpu.memory_space<vmem>>, %arg5: memref<128x384xbf16, #tpu.memory_space<vmem>>, %arg6: memref<128x384xbf16, #tpu.memory_space<vmem>>, %arg7: memref<1x384xf32, #tpu.memory_space<vmem>>, %arg8: memref<128x384xbf16, #tpu.memory_space<vmem>>, %arg9: memref<1x384xf32, #tpu.memory_space<vmem>>, %arg10: memref<128x128xbf16, #tpu.memory_space<vmem>>, %arg11: memref<1x128xf32, #tpu.memory_space<vmem>>, %arg12: memref<128x512xbf16, #tpu.memory_space<vmem>>, %arg13: memref<128x512xbf16, #tpu.memory_space<vmem>>, %arg14: memref<1x512xf32, #tpu.memory_space<vmem>>, %arg15: memref<8x512xf32, #tpu.memory_space<vmem>>, %arg16: memref<8x128xf32, #tpu.memory_space<vmem>>, %arg17: memref<8x128xf32, #tpu.memory_space<vmem>>, %arg18: memref<8x16xf32, #tpu.memory_space<vmem>>, %arg19: memref<8x128xbf16, #tpu.memory_space<vmem>>, %arg20: memref<8x128xbf16, #tpu.memory_space<vmem>>, %arg21: memref<8x1xf32, #tpu.memory_space<vmem>>, %arg22: memref<8x1xf32, #tpu.memory_space<vmem>>) attributes {dimension_semantics = [#tpu.dimension_semantics<arbitrary>], iteration_bounds = array<i64: 1>, scalar_prefetch = 0 : i64, scratch_operands = 4 : i64, tpu.core_type = #tpu.core_type<tc>, window_params = [{pipeline_mode = #tpu.pipeline_mode<synchronous>, transform_indices = @transform_0, window_bounds = array<i64: 8, 128>}, {pipeline_mode = #tpu.pipeline_mode<synchronous>, transform_indices = @transform_1, window_bounds = array<i64: 8, 128>}, {pipeline_mode = #tpu.pipeline_mode<synchronous>, transform_indices = @transform_2, window_bounds = array<i64: 8, 128>}, {pipeline_mode = #tpu.pipeline_mode<synchronous>, transform_indices = @transform_3, window_bounds = array<i64: 8, 16, 128>}, {pipeline_mode = #tpu.pipeline_mode<synchronous>, transform_indices = @transform_4, window_bounds = array<i64: 128, 384>}, {pipeline_mode = #tpu.pipeline_mode<synchronous>, transform_indices = @transform_5, window_bounds = array<i64: 128, 384>}, {pipeline_mode = #tpu.pipeline_mode<synchronous>, transform_indices = @transform_6, window_bounds = array<i64: 1, 384>}, {pipeline_mode = #tpu.pipeline_mode<synchronous>, transform_indices = @transform_7, window_bounds = array<i64: 128, 384>}, {pipeline_mode = #tpu.pipeline_mode<synchronous>, transform_indices = @transform_8, window_bounds = array<i64: 1, 384>}, {pipeline_mode = #tpu.pipeline_mode<synchronous>, transform_indices = @transform_9, window_bounds = array<i64: 128, 128>}, {pipeline_mode = #tpu.pipeline_mode<synchronous>, transform_indices = @transform_10, window_bounds = array<i64: 1, 128>}, {transform_indices = @transform_11, window_bounds = array<i64: 128, 512>}, {transform_indices = @transform_12, window_bounds = array<i64: 128, 512>}, {transform_indices = @transform_13, window_bounds = array<i64: 1, 512>}, {pipeline_mode = #tpu.pipeline_mode<synchronous>, transform_indices = @transform_14, window_bounds = array<i64: 8, 512>}, {pipeline_mode = #tpu.pipeline_mode<synchronous>, transform_indices = @transform_15, window_bounds = array<i64: 8, 128>}, {pipeline_mode = #tpu.pipeline_mode<synchronous>, transform_indices = @transform_16, window_bounds = array<i64: 8, 128>}, {pipeline_mode = #tpu.pipeline_mode<synchronous>, transform_indices = @transform_17, window_bounds = array<i64: 8, 16>}]} {
    %c0_i32 = arith.constant 0 : i32
    %0 = arith.cmpi eq, %arg0, %c0_i32 : i32
    %1 = arith.extui %0 : i1 to i32
    %c0_i32_0 = arith.constant 0 : i32
    %2 = arith.cmpi ne, %1, %c0_i32_0 : i32
    scf.if %2 {
      %c0_24 = arith.constant 0 : index
      %c0_25 = arith.constant 0 : index
      %36 = vector.load %arg1[%c0_24, %c0_25] : memref<8x128xbf16, #tpu.memory_space<vmem>>, vector<8x128xbf16>
      %c0_26 = arith.constant 0 : index
      %c0_27 = arith.constant 0 : index
      %37 = vector.load %arg2[%c0_26, %c0_27] : memref<8x128xf32, #tpu.memory_space<vmem>>, vector<8x128xf32>
      %c0_28 = arith.constant 0 : index
      %c0_29 = arith.constant 0 : index
      %38 = vector.load %arg3[%c0_28, %c0_29] : memref<8x128xf32, #tpu.memory_space<vmem>>, vector<8x128xf32>
      %39 = arith.truncf %37 : vector<8x128xf32> to vector<8x128xbf16>
      %40 = arith.truncf %38 : vector<8x128xf32> to vector<8x128xbf16>
      %c0_30 = arith.constant 0 : index
      %c0_31 = arith.constant 0 : index
      %41 = vector.load %arg5[%c0_30, %c0_31] : memref<128x384xbf16, #tpu.memory_space<vmem>>, vector<128x384xbf16>
      %cst_32 = arith.constant dense<0.000000e+00> : vector<8x384xf32>
      %42 = tpu.matmul %36, %41, %cst_32 {dimension_numbers = #tpu.dot_dimension_numbers<[1], [0], [0], [1], [0, 0, 1, 1], [], []>} : vector<8x128xbf16>, vector<128x384xbf16>, vector<8x384xf32> -> vector<8x384xf32>
      %c0_33 = arith.constant 0 : index
      %c0_34 = arith.constant 0 : index
      %43 = vector.load %arg6[%c0_33, %c0_34] : memref<128x384xbf16, #tpu.memory_space<vmem>>, vector<128x384xbf16>
      %cst_35 = arith.constant dense<0.000000e+00> : vector<8x384xf32>
      %44 = tpu.matmul %39, %43, %cst_35 {dimension_numbers = #tpu.dot_dimension_numbers<[1], [0], [0], [1], [0, 0, 1, 1], [], []>} : vector<8x128xbf16>, vector<128x384xbf16>, vector<8x384xf32> -> vector<8x384xf32>
      %45 = arith.addf %42, %44 : vector<8x384xf32>
      %c0_36 = arith.constant 0 : index
      %c0_37 = arith.constant 0 : index
      %46 = vector.load %arg7[%c0_36, %c0_37] : memref<1x384xf32, #tpu.memory_space<vmem>>, vector<1x384xf32>
      %47 = vector.broadcast %46 : vector<1x384xf32> to vector<8x384xf32>
      %48 = arith.addf %45, %47 : vector<8x384xf32>
      %c0_38 = arith.constant 0 : index
      %c0_39 = arith.constant 0 : index
      %49 = vector.load %arg8[%c0_38, %c0_39] : memref<128x384xbf16, #tpu.memory_space<vmem>>, vector<128x384xbf16>
      %cst_40 = arith.constant dense<0.000000e+00> : vector<8x384xf32>
      %50 = tpu.matmul %40, %49, %cst_40 {dimension_numbers = #tpu.dot_dimension_numbers<[1], [0], [0], [1], [0, 0, 1, 1], [], []>} : vector<8x128xbf16>, vector<128x384xbf16>, vector<8x384xf32> -> vector<8x384xf32>
      %c0_41 = arith.constant 0 : index
      %c0_42 = arith.constant 0 : index
      %51 = vector.load %arg9[%c0_41, %c0_42] : memref<1x384xf32, #tpu.memory_space<vmem>>, vector<1x384xf32>
      %52 = vector.broadcast %51 : vector<1x384xf32> to vector<8x384xf32>
      %53 = arith.addf %50, %52 : vector<8x384xf32>
      %54 = vector.extract_strided_slice %48 {offsets = [0, 0], sizes = [8, 128], strides = [1, 1]} : vector<8x384xf32> to vector<8x128xf32>
      %55 = vector.extract_strided_slice %53 {offsets = [0, 0], sizes = [8, 128], strides = [1, 1]} : vector<8x384xf32> to vector<8x128xf32>
      %56 = arith.addf %54, %55 : vector<8x128xf32>
      %57 = arith.negf %56 : vector<8x128xf32>
      %58 = math.exp %57 : vector<8x128xf32>
      %cst_43 = arith.constant 1.000000e+00 : f32
      %59 = vector.broadcast %cst_43 : f32 to vector<8x128xf32>
      %60 = arith.addf %59, %58 : vector<8x128xf32>
      %61 = arith.divf %59, %60 : vector<8x128xf32>
      %62 = vector.extract_strided_slice %48 {offsets = [0, 128], sizes = [8, 128], strides = [1, 1]} : vector<8x384xf32> to vector<8x128xf32>
      %63 = vector.extract_strided_slice %53 {offsets = [0, 128], sizes = [8, 128], strides = [1, 1]} : vector<8x384xf32> to vector<8x128xf32>
      %64 = arith.addf %62, %63 : vector<8x128xf32>
      %65 = arith.negf %64 : vector<8x128xf32>
      %66 = math.exp %65 : vector<8x128xf32>
      %cst_44 = arith.constant 1.000000e+00 : f32
      %67 = vector.broadcast %cst_44 : f32 to vector<8x128xf32>
      %68 = arith.addf %67, %66 : vector<8x128xf32>
      %69 = arith.divf %67, %68 : vector<8x128xf32>
      %70 = vector.extract_strided_slice %48 {offsets = [0, 256], sizes = [8, 128], strides = [1, 1]} : vector<8x384xf32> to vector<8x128xf32>
      %71 = vector.extract_strided_slice %53 {offsets = [0, 256], sizes = [8, 128], strides = [1, 1]} : vector<8x384xf32> to vector<8x128xf32>
      %72 = arith.mulf %61, %71 : vector<8x128xf32>
      %73 = arith.addf %70, %72 : vector<8x128xf32>
      %74 = math.tanh %73 : vector<8x128xf32>
      %cst_45 = arith.constant 1.000000e+00 : f32
      %75 = vector.broadcast %cst_45 : f32 to vector<8x128xf32>
      %76 = arith.subf %75, %69 : vector<8x128xf32>
      %77 = arith.mulf %76, %74 : vector<8x128xf32>
      %78 = arith.mulf %69, %38 : vector<8x128xf32>
      %79 = arith.addf %77, %78 : vector<8x128xf32>
      %c0_46 = arith.constant 0 : index
      %c0_47 = arith.constant 0 : index
      %c0_48 = arith.constant 0 : index
      %80 = vector.load %arg4[%c0_46, %c0_47, %c0_48] : memref<8x16x128xf32, #tpu.memory_space<vmem>>, vector<8x16x128xf32>
      %81 = arith.truncf %79 : vector<8x128xf32> to vector<8x128xbf16>
      %c0_49 = arith.constant 0 : index
      %c0_50 = arith.constant 0 : index
      %82 = vector.load %arg10[%c0_49, %c0_50] : memref<128x128xbf16, #tpu.memory_space<vmem>>, vector<128x128xbf16>
      %cst_51 = arith.constant dense<0.000000e+00> : vector<8x128xf32>
      %83 = tpu.matmul %81, %82, %cst_51 {dimension_numbers = #tpu.dot_dimension_numbers<[1], [0], [0], [1], [0, 0, 1, 1], [], []>} : vector<8x128xbf16>, vector<128x128xbf16>, vector<8x128xf32> -> vector<8x128xf32>
      %c0_52 = arith.constant 0 : index
      %c0_53 = arith.constant 0 : index
      %84 = vector.load %arg11[%c0_52, %c0_53] : memref<1x128xf32, #tpu.memory_space<vmem>>, vector<1x128xf32>
      %85 = vector.broadcast %84 : vector<1x128xf32> to vector<8x128xf32>
      %86 = arith.mulf %79, %85 : vector<8x128xf32>
      %cst_54 = arith.constant dense<0.000000e+00> : vector<8xf32>
      %87 = vector.multi_reduction <add>, %86, %cst_54 [1] : vector<8x128xf32> to vector<8xf32>
      %88 = vector.shape_cast %87 : vector<8xf32> to vector<8x1xf32>
      %89 = vector.shape_cast %83 : vector<8x128xf32> to vector<8x1x128xf32>
      %90 = vector.broadcast %89 : vector<8x1x128xf32> to vector<8x16x128xf32>
      %91 = arith.mulf %90, %80 : vector<8x16x128xf32>
      %cst_55 = arith.constant dense<0.000000e+00> : vector<8x16xf32>
      %92 = vector.multi_reduction <add>, %91, %cst_55 [2] : vector<8x16x128xf32> to vector<8x16xf32>
      %93 = vector.broadcast %88 : vector<8x1xf32> to vector<8x16xf32>
      %94 = arith.addf %92, %93 : vector<8x16xf32>
      %cst_56 = arith.constant dense<0xFF800000> : vector<8xf32>
      %95 = vector.multi_reduction <maximumf>, %94, %cst_56 [1] : vector<8x16xf32> to vector<8xf32>
      %96 = vector.shape_cast %95 : vector<8xf32> to vector<8x1xf32>
      %97 = vector.broadcast %96 : vector<8x1xf32> to vector<8x16xf32>
      %98 = arith.subf %94, %97 : vector<8x16xf32>
      %99 = math.exp %98 : vector<8x16xf32>
      %cst_57 = arith.constant dense<0.000000e+00> : vector<8xf32>
      %100 = vector.multi_reduction <add>, %99, %cst_57 [1] : vector<8x16xf32> to vector<8xf32>
      %101 = vector.shape_cast %100 : vector<8xf32> to vector<8x1xf32>
      %102 = tpu.reciprocal %101 {approx = true} : vector<8x1xf32> -> vector<8x1xf32>
      %103 = vector.broadcast %102 : vector<8x1xf32> to vector<8x16xf32>
      %104 = arith.mulf %99, %103 : vector<8x16xf32>
      %105 = vector.shape_cast %104 : vector<8x16xf32> to vector<8x16x1xf32>
      %106 = vector.broadcast %105 : vector<8x16x1xf32> to vector<8x16x128xf32>
      %107 = arith.mulf %106, %80 : vector<8x16x128xf32>
      %cst_58 = arith.constant dense<0.000000e+00> : vector<8x128xf32>
      %108 = vector.multi_reduction <add>, %107, %cst_58 [1] : vector<8x16x128xf32> to vector<8x128xf32>
      %109 = arith.truncf %79 : vector<8x128xf32> to vector<8x128xbf16>
      %c0_59 = arith.constant 0 : index
      %c0_60 = arith.constant 0 : index
      %110 = vector.load %arg19[%c0_59, %c0_60] : memref<8x128xbf16, #tpu.memory_space<vmem>>, vector<8x128xbf16>
      tpu.vector_store %arg19[%c0_59, %c0_60], %109 {strides = array<i32>} : memref<8x128xbf16, #tpu.memory_space<vmem>>, vector<8x128xbf16>,
      %111 = arith.truncf %108 : vector<8x128xf32> to vector<8x128xbf16>
      %c0_61 = arith.constant 0 : index
      %c0_62 = arith.constant 0 : index
      %112 = vector.load %arg20[%c0_61, %c0_62] : memref<8x128xbf16, #tpu.memory_space<vmem>>, vector<8x128xbf16>
      tpu.vector_store %arg20[%c0_61, %c0_62], %111 {strides = array<i32>} : memref<8x128xbf16, #tpu.memory_space<vmem>>, vector<8x128xbf16>,
      %cst_63 = arith.constant -1.000000e+30 : f32
      %113 = vector.broadcast %cst_63 : f32 to vector<8x1xf32>
      %c0_64 = arith.constant 0 : index
      %c0_65 = arith.constant 0 : index
      %114 = vector.load %arg21[%c0_64, %c0_65] : memref<8x1xf32, #tpu.memory_space<vmem>>, vector<8x1xf32>
      tpu.vector_store %arg21[%c0_64, %c0_65], %113 {strides = array<i32>} : memref<8x1xf32, #tpu.memory_space<vmem>>, vector<8x1xf32>,
      %cst_66 = arith.constant 0.000000e+00 : f32
      %115 = vector.broadcast %cst_66 : f32 to vector<8x1xf32>
      %c0_67 = arith.constant 0 : index
      %c0_68 = arith.constant 0 : index
      %116 = vector.load %arg22[%c0_67, %c0_68] : memref<8x1xf32, #tpu.memory_space<vmem>>, vector<8x1xf32>
      tpu.vector_store %arg22[%c0_67, %c0_68], %115 {strides = array<i32>} : memref<8x1xf32, #tpu.memory_space<vmem>>, vector<8x1xf32>,
      %c0_69 = arith.constant 0 : index
      %c0_70 = arith.constant 0 : index
      %117 = vector.load %arg17[%c0_69, %c0_70] : memref<8x128xf32, #tpu.memory_space<vmem>>, vector<8x128xf32>
      tpu.vector_store %arg17[%c0_69, %c0_70], %79 {strides = array<i32>} : memref<8x128xf32, #tpu.memory_space<vmem>>, vector<8x128xf32>,
      %c0_71 = arith.constant 0 : index
      %c0_72 = arith.constant 0 : index
      %118 = vector.load %arg16[%c0_71, %c0_72] : memref<8x128xf32, #tpu.memory_space<vmem>>, vector<8x128xf32>
      tpu.vector_store %arg16[%c0_71, %c0_72], %108 {strides = array<i32>} : memref<8x128xf32, #tpu.memory_space<vmem>>, vector<8x128xf32>,
      %c0_73 = arith.constant 0 : index
      %c0_74 = arith.constant 0 : index
      %119 = vector.load %arg18[%c0_73, %c0_74] : memref<8x16xf32, #tpu.memory_space<vmem>>, vector<8x16xf32>
      tpu.vector_store %arg18[%c0_73, %c0_74], %104 {strides = array<i32>} : memref<8x16xf32, #tpu.memory_space<vmem>>, vector<8x16xf32>,
    } else {
    }
    %c0 = arith.constant 0 : index
    %c0_1 = arith.constant 0 : index
    %3 = vector.load %arg19[%c0, %c0_1] : memref<8x128xbf16, #tpu.memory_space<vmem>>, vector<8x128xbf16>
    %c0_2 = arith.constant 0 : index
    %c0_3 = arith.constant 0 : index
    %4 = vector.load %arg12[%c0_2, %c0_3] : memref<128x512xbf16, #tpu.memory_space<vmem>>, vector<128x512xbf16>
    %cst = arith.constant dense<0.000000e+00> : vector<8x512xf32>
    %5 = tpu.matmul %3, %4, %cst {dimension_numbers = #tpu.dot_dimension_numbers<[1], [0], [0], [1], [0, 0, 1, 1], [], []>} : vector<8x128xbf16>, vector<128x512xbf16>, vector<8x512xf32> -> vector<8x512xf32>
    %c0_4 = arith.constant 0 : index
    %c0_5 = arith.constant 0 : index
    %6 = vector.load %arg20[%c0_4, %c0_5] : memref<8x128xbf16, #tpu.memory_space<vmem>>, vector<8x128xbf16>
    %c0_6 = arith.constant 0 : index
    %c0_7 = arith.constant 0 : index
    %7 = vector.load %arg13[%c0_6, %c0_7] : memref<128x512xbf16, #tpu.memory_space<vmem>>, vector<128x512xbf16>
    %cst_8 = arith.constant dense<0.000000e+00> : vector<8x512xf32>
    %8 = tpu.matmul %6, %7, %cst_8 {dimension_numbers = #tpu.dot_dimension_numbers<[1], [0], [0], [1], [0, 0, 1, 1], [], []>} : vector<8x128xbf16>, vector<128x512xbf16>, vector<8x512xf32> -> vector<8x512xf32>
    %9 = arith.addf %5, %8 : vector<8x512xf32>
    %c0_9 = arith.constant 0 : index
    %c0_10 = arith.constant 0 : index
    %10 = vector.load %arg14[%c0_9, %c0_10] : memref<1x512xf32, #tpu.memory_space<vmem>>, vector<1x512xf32>
    %11 = vector.broadcast %10 : vector<1x512xf32> to vector<8x512xf32>
    %12 = arith.addf %9, %11 : vector<8x512xf32>
    %c512_i32 = arith.constant 512 : i32
    %13 = arith.muli %arg0, %c512_i32 : i32
    %14 = tpu.assume_multiple %13, 512 : i32
    %c0_11 = arith.constant 0 : index
    %15 = arith.index_cast %14 : i32 to index
    %16 = vector.load %arg15[%c0_11, %15] : memref<8x512xf32, #tpu.memory_space<vmem>>, vector<8x512xf32>
    tpu.vector_store %arg15[%c0_11, %15], %12 {strides = array<i32>} : memref<8x512xf32, #tpu.memory_space<vmem>>, vector<8x512xf32>,
    %c0_12 = arith.constant 0 : index
    %c0_13 = arith.constant 0 : index
    %17 = vector.load %arg21[%c0_12, %c0_13] : memref<8x1xf32, #tpu.memory_space<vmem>>, vector<8x1xf32>
    %cst_14 = arith.constant dense<0xFF800000> : vector<8xf32>
    %18 = vector.multi_reduction <maximumf>, %12, %cst_14 [1] : vector<8x512xf32> to vector<8xf32>
    %19 = vector.shape_cast %18 : vector<8xf32> to vector<8x1xf32>
    %20 = arith.maximumf %17, %19 : vector<8x1xf32>
    %c0_15 = arith.constant 0 : index
    %c0_16 = arith.constant 0 : index
    %21 = vector.load %arg22[%c0_15, %c0_16] : memref<8x1xf32, #tpu.memory_space<vmem>>, vector<8x1xf32>
    %22 = arith.subf %17, %20 : vector<8x1xf32>
    %23 = math.exp %22 : vector<8x1xf32>
    %24 = arith.mulf %21, %23 : vector<8x1xf32>
    %25 = vector.broadcast %20 : vector<8x1xf32> to vector<8x512xf32>
    %26 = arith.subf %12, %25 : vector<8x512xf32>
    %27 = math.exp %26 : vector<8x512xf32>
    %cst_17 = arith.constant dense<0.000000e+00> : vector<8xf32>
    %28 = vector.multi_reduction <add>, %27, %cst_17 [1] : vector<8x512xf32> to vector<8xf32>
    %29 = vector.shape_cast %28 : vector<8xf32> to vector<8x1xf32>
    %30 = arith.addf %24, %29 : vector<8x1xf32>
    %c0_18 = arith.constant 0 : index
    %c0_19 = arith.constant 0 : index
    %31 = vector.load %arg22[%c0_18, %c0_19] : memref<8x1xf32, #tpu.memory_space<vmem>>, vector<8x1xf32>
    tpu.vector_store %arg22[%c0_18, %c0_19], %30 {strides = array<i32>} : memref<8x1xf32, #tpu.memory_space<vmem>>, vector<8x1xf32>,
    %c0_20 = arith.constant 0 : index
    %c0_21 = arith.constant 0 : index
    %32 = vector.load %arg21[%c0_20, %c0_21] : memref<8x1xf32, #tpu.memory_space<vmem>>, vector<8x1xf32>
    tpu.vector_store %arg21[%c0_20, %c0_21], %20 {strides = array<i32>} : memref<8x1xf32, #tpu.memory_space<vmem>>, vector<8x1xf32>,
    %c0_i32_22 = arith.constant 0 : i32
    %33 = arith.cmpi eq, %arg0, %c0_i32_22 : i32
    %34 = arith.extui %33 : i1 to i32
    %c0_i32_23 = arith.constant 0 : i32
    %35 = arith.cmpi ne, %34, %c0_i32_23 : i32
    scf.if %35 {
      %c0_24 = arith.constant 0 : index
      %c0_25 = arith.constant 0 : index
      %36 = vector.load %arg21[%c0_24, %c0_25] : memref<8x1xf32, #tpu.memory_space<vmem>>, vector<8x1xf32>
      %c0_26 = arith.constant 0 : index
      %c0_27 = arith.constant 0 : index
      %37 = vector.load %arg22[%c0_26, %c0_27] : memref<8x1xf32, #tpu.memory_space<vmem>>, vector<8x1xf32>
      %38 = math.log %37 : vector<8x1xf32>
      %39 = arith.addf %36, %38 : vector<8x1xf32>
      %c0_28 = arith.constant 0 : index
      %c0_29 = arith.constant 0 : index
      %40 = vector.load %arg15[%c0_28, %c0_29] : memref<8x512xf32, #tpu.memory_space<vmem>>, vector<8x512xf32>
      %41 = vector.broadcast %39 : vector<8x1xf32> to vector<8x512xf32>
      %42 = arith.subf %40, %41 : vector<8x512xf32>
      %c0_30 = arith.constant 0 : index
      %c0_31 = arith.constant 0 : index
      %43 = vector.load %arg15[%c0_30, %c0_31] : memref<8x512xf32, #tpu.memory_space<vmem>>, vector<8x512xf32>
      tpu.vector_store %arg15[%c0_30, %c0_31], %42 {strides = array<i32>} : memref<8x512xf32, #tpu.memory_space<vmem>>, vector<8x512xf32>,
    } else {
    }
    return
  }
  func.func @transform_0(%arg0: i32) -> (i32, i32) {
    %c0_i32 = arith.constant 0 : i32
    %c0_i32_0 = arith.constant 0 : i32
    %c0_i32_1 = arith.constant 0 : i32
    return %c0_i32, %c0_i32_0 : i32, i32
  }
  func.func @transform_1(%arg0: i32) -> (i32, i32) {
    %c0_i32 = arith.constant 0 : i32
    %c0_i32_0 = arith.constant 0 : i32
    %c0_i32_1 = arith.constant 0 : i32
    return %c0_i32, %c0_i32_0 : i32, i32
  }
  func.func @transform_2(%arg0: i32) -> (i32, i32) {
    %c0_i32 = arith.constant 0 : i32
    %c0_i32_0 = arith.constant 0 : i32
    %c0_i32_1 = arith.constant 0 : i32
    return %c0_i32, %c0_i32_0 : i32, i32
  }
  func.func @transform_3(%arg0: i32) -> (i32, i32, i32) {
    %c0_i32 = arith.constant 0 : i32
    %c0_i32_0 = arith.constant 0 : i32
    %c0_i32_1 = arith.constant 0 : i32
    %c0_i32_2 = arith.constant 0 : i32
    return %c0_i32, %c0_i32_0, %c0_i32_1 : i32, i32, i32
  }
  func.func @transform_4(%arg0: i32) -> (i32, i32) {
    %c0_i32 = arith.constant 0 : i32
    %c0_i32_0 = arith.constant 0 : i32
    %c0_i32_1 = arith.constant 0 : i32
    return %c0_i32, %c0_i32_0 : i32, i32
  }
  func.func @transform_5(%arg0: i32) -> (i32, i32) {
    %c0_i32 = arith.constant 0 : i32
    %c0_i32_0 = arith.constant 0 : i32
    %c0_i32_1 = arith.constant 0 : i32
    return %c0_i32, %c0_i32_0 : i32, i32
  }
  func.func @transform_6(%arg0: i32) -> (i32, i32) {
    %c0_i32 = arith.constant 0 : i32
    %c0_i32_0 = arith.constant 0 : i32
    %c0_i32_1 = arith.constant 0 : i32
    return %c0_i32, %c0_i32_0 : i32, i32
  }
  func.func @transform_7(%arg0: i32) -> (i32, i32) {
    %c0_i32 = arith.constant 0 : i32
    %c0_i32_0 = arith.constant 0 : i32
    %c0_i32_1 = arith.constant 0 : i32
    return %c0_i32, %c0_i32_0 : i32, i32
  }
  func.func @transform_8(%arg0: i32) -> (i32, i32) {
    %c0_i32 = arith.constant 0 : i32
    %c0_i32_0 = arith.constant 0 : i32
    %c0_i32_1 = arith.constant 0 : i32
    return %c0_i32, %c0_i32_0 : i32, i32
  }
  func.func @transform_9(%arg0: i32) -> (i32, i32) {
    %c0_i32 = arith.constant 0 : i32
    %c0_i32_0 = arith.constant 0 : i32
    %c0_i32_1 = arith.constant 0 : i32
    return %c0_i32, %c0_i32_0 : i32, i32
  }
  func.func @transform_10(%arg0: i32) -> (i32, i32) {
    %c0_i32 = arith.constant 0 : i32
    %c0_i32_0 = arith.constant 0 : i32
    %c0_i32_1 = arith.constant 0 : i32
    return %c0_i32, %c0_i32_0 : i32, i32
  }
  func.func @transform_11(%arg0: i32) -> (i32, i32) {
    %c0_i32 = arith.constant 0 : i32
    %c0_i32_0 = arith.constant 0 : i32
    return %c0_i32, %arg0 : i32, i32
  }
  func.func @transform_12(%arg0: i32) -> (i32, i32) {
    %c0_i32 = arith.constant 0 : i32
    %c0_i32_0 = arith.constant 0 : i32
    return %c0_i32, %arg0 : i32, i32
  }
  func.func @transform_13(%arg0: i32) -> (i32, i32) {
    %c0_i32 = arith.constant 0 : i32
    %c0_i32_0 = arith.constant 0 : i32
    return %c0_i32, %arg0 : i32, i32
  }
  func.func @transform_14(%arg0: i32) -> (i32, i32) {
    %c0_i32 = arith.constant 0 : i32
    %c0_i32_0 = arith.constant 0 : i32
    %c0_i32_1 = arith.constant 0 : i32
    return %c0_i32, %c0_i32_0 : i32, i32
  }
  func.func @transform_15(%arg0: i32) -> (i32, i32) {
    %c0_i32 = arith.constant 0 : i32
    %c0_i32_0 = arith.constant 0 : i32
    %c0_i32_1 = arith.constant 0 : i32
    return %c0_i32, %c0_i32_0 : i32, i32
  }
  func.func @transform_16(%arg0: i32) -> (i32, i32) {
    %c0_i32 = arith.constant 0 : i32
    %c0_i32_0 = arith.constant 0 : i32
    %c0_i32_1 = arith.constant 0 : i32
    return %c0_i32, %c0_i32_0 : i32, i32
  }
  func.func @transform_17(%arg0: i32) -> (i32, i32) {
    %c0_i32 = arith.constant 0 : i32
    %c0_i32_0 = arith.constant 0 : i32
    %c0_i32_1 = arith.constant 0 : i32
    return %c0_i32, %c0_i32_0 : i32, i32
  }
}

</mosaic_0001>

<llo_original>
// kernel: attention_decoder_forward.1
$region0: #{attention_decoder_forward.1}
  #allocation0 [shape = 'u32[]', space=smem, size = 0x4, offset = 0x4, fixed_abs, tag = 'smem constant byte address 0x4 - core index']
  #allocation1 [shape = 'u32[72,128]{1,0:T(1,128)}', space=vmem, size = 0x9000, scoped, tag = 'internal scratch']
  #allocation2 [shape = 'bf16[8,128]{1,0:T(8,128)(2,1)}', space=vmem, size = 0x800, scoped, tag = 'scratch operand']
  #allocation3 [shape = 'bf16[8,128]{1,0:T(8,128)(2,1)}', space=vmem, size = 0x800, scoped, tag = 'scratch operand']
  #allocation4 [shape = 'f32[8,1]{1,0:T(8,128)}', space=vmem, size = 0x1000, scoped, tag = 'scratch operand']
  #allocation5 [shape = 'f32[8,1]{1,0:T(8,128)}', space=vmem, size = 0x1000, scoped, tag = 'scratch operand']
  %s0 = inlined_call_operand.vmem [shape: bf16[8,128], index: 0, kind: input, shape index: {}]
  %s1 = inlined_call_operand.vmem [shape: f32[8,128], index: 1, kind: input, shape index: {}, may-alias: {1,15}]
  %s2 = inlined_call_operand.vmem [shape: f32[8,128], index: 2, kind: input, shape index: {}, may-alias: {2,16}]
  %s3 = inlined_call_operand.hbm [shape: f32[8,16,128], index: 3, kind: input, shape index: {}]
  %s4 = inlined_call_operand.hbm [shape: bf16[128,384], index: 4, kind: input, shape index: {}]
  %s5 = inlined_call_operand.hbm [shape: bf16[128,384], index: 5, kind: input, shape index: {}]
  %s6 = inlined_call_operand.vmem [shape: f32[1,384], index: 6, kind: input, shape index: {}]
  %s7 = inlined_call_operand.hbm [shape: bf16[128,384], index: 7, kind: input, shape index: {}]
  %s8 = inlined_call_operand.vmem [shape: f32[1,384], index: 8, kind: input, shape index: {}]
  %s9 = inlined_call_operand.vmem [shape: bf16[128,128], index: 9, kind: input, shape index: {}]
  %s10 = inlined_call_operand.vmem [shape: f32[1,128], index: 10, kind: input, shape index: {}]
  %s11 = inlined_call_operand.hbm [shape: bf16[128,512], index: 11, kind: input, shape index: {}]
  %s12 = inlined_call_operand.hbm [shape: bf16[128,512], index: 12, kind: input, shape index: {}]
  %s13 = inlined_call_operand.vmem [shape: f32[1,512], index: 13, kind: input, shape index: {}]
  %s14 = inlined_call_operand.hbm [shape: f32[8,512], index: 14, kind: output, shape index: {0}]
  %s15 = inlined_call_operand.vmem [shape: f32[8,128], index: 15, kind: output, shape index: {1}, may-alias: {1,15}]
  %s16 = inlined_call_operand.vmem [shape: f32[8,128], index: 16, kind: output, shape index: {2}, may-alias: {2,16}]
  %s17 = inlined_call_operand.hbm [shape: f32[8,16], index: 17, kind: output, shape index: {3}]
  %18 = xla_tuple %s14, %s15, %s16, %s17
  %s19 = sld [smem:[#allocation0]]
  $region122: #{attention_decoder_forward.1} parent=0
    _
  %s21 = ssub.s32 1, %s19
  %s22 = scalar_select 0, %s21, %s19
  $region1: #{attention_decoder_forward.1} parent=0
    #allocation6 [shape = 'u8[65536]{0}', space=vmem, size = 0x10000, scoped, tag = 'input window, operand 3, single buffered']
    #allocation7 [shape = 's32[1]{0}', space=sflag, size = 0x4, scoped, tag = 'scoped memory for attention_decoder_forward.1']
    #allocation8 [shape = 's32[1]{0}', space=sflag, size = 0x4, scoped, tag = 'scoped memory for attention_decoder_forward.1']
    #allocation9 [shape = 'u8[98304]{0}', space=vmem, size = 0x18000, scoped, tag = 'input window, operand 4, single buffered']
    #allocation10 [shape = 's32[1]{0}', space=sflag, size = 0x4, scoped, tag = 'scoped memory for attention_decoder_forward.1']
    #allocation11 [shape = 'u8[98304]{0}', space=vmem, size = 0x18000, scoped, tag = 'input window, operand 5, single buffered']
    #allocation12 [shape = 'u8[98304]{0}', space=vmem, size = 0x18000, scoped, tag = 'input window, operand 7, single buffered']
    #allocation13 [shape = 's32[1]{0}', space=sflag, size = 0x4, scoped, tag = 'scoped memory for attention_decoder_forward.1']
    #allocation14 [shape = 'u8[131072]{0}', space=vmem, size = 0x20000, scoped, tag = 'input window, operand 11, single buffered']
    #allocation15 [shape = 'u8[131072]{0}', space=vmem, size = 0x20000, scoped, tag = 'input window, operand 12, single buffered']
    #allocation16 [shape = 's32[1]{0}', space=sflag, size = 0x4, scoped, tag = 'scoped memory for attention_decoder_forward.1']
    #allocation17 [shape = 'u8[16384]{0}', space=vmem, size = 0x4000, scoped, tag = 'output window, operand 0, single buffered']
    #allocation18 [shape = 'u8[4096]{0}', space=vmem, size = 0x1000, scoped, tag = 'output window, operand 3, single buffered']
    #allocation19 [shape = 's32[1]{0}', space=sflag, size = 0x4, scoped, tag = 'scoped memory for attention_decoder_forward.1']
    %23 = vsyncpa [#allocation7], 0
    %24 = vsyncpa [#allocation10], 0
    %25 = vsyncpa [#allocation13], 0
    %26 = vsyncpa [#allocation16], 0
    %27 = vsyncpa [#allocation8], 0
    %28 = vsyncpa [#allocation19], 0
    // Predicated region
    $region2: #{attention_decoder_forward.1} parent=1 // pred_check
      _
    $region3: #{attention_decoder_forward.1} parent=1 // pred_check_branch
      %30 = sbr.rel (0) target = $region5
    $region4: #{attention_decoder_forward.1} parent=1 // pred_region
      _
    $region5: #{attention_decoder_forward.1} parent=1 // pred_fallthru
      _
    // Predicated region
    $region6: #{attention_decoder_forward.1} parent=1 // pred_check
      _
    $region7: #{attention_decoder_forward.1} parent=1 // pred_check_branch
      %32 = sbr.rel (0) target = $region9
    $region8: #{attention_decoder_forward.1} parent=1 // pred_region
      _
    $region9: #{attention_decoder_forward.1} parent=1 // pred_fallthru
      _
    // Predicated region
    $region10: #{attention_decoder_forward.1} parent=1 // pred_check
      _
    $region11: #{attention_decoder_forward.1} parent=1 // pred_check_branch
      %34 = sbr.rel (0) target = $region13
    $region12: #{attention_decoder_forward.1} parent=1 // pred_region
      _
    $region13: #{attention_decoder_forward.1} parent=1 // pred_fallthru
      _
    // Predicated region
    $region14: #{attention_decoder_forward.1} parent=1 // pred_check
      _
    $region15: #{attention_decoder_forward.1} parent=1 // pred_check_branch
      %36 = sbr.rel (0) target = $region17
    $region16: #{attention_decoder_forward.1} parent=1 // pred_region
      %38 = vsyncadd [#allocation7], 0
      %s39 = sshll.u32 %s3, 4
      %s40 = int_to_ptr.hbm [resolvable:$true] %s39
      %s41 = sshll.u32 [#allocation6], 4
      %s42 = int_to_ptr.vmem [resolvable:$true] %s41
      %47 = dma.hbm_to_vmem [thread:$0]  %s40, 2048, %s42, [#allocation7], 128, 128, 8
    $region17: #{attention_decoder_forward.1} parent=1 // pred_fallthru
      _
    // Predicated region
    $region18: #{attention_decoder_forward.1} parent=1 // pred_check
      _
    $region19: #{attention_decoder_forward.1} parent=1 // pred_check_branch
      %49 = sbr.rel (0) target = $region21
    $region20: #{attention_decoder_forward.1} parent=1 // pred_region
      %51 = vsyncadd [#allocation10], 0
      %s52 = sshll.u32 %s4, 4
      %s53 = int_to_ptr.hbm [resolvable:$true] %s52
      %s54 = sshll.u32 [#allocation9], 4
      %s55 = int_to_ptr.vmem [resolvable:$true] %s54
      %60 = dma.hbm_to_vmem [thread:$0]  %s53, 3072, %s55, [#allocation10], 192, 192, 12
    $region21: #{attention_decoder_forward.1} parent=1 // pred_fallthru
      _
    // Predicated region
    $region22: #{attention_decoder_forward.1} parent=1 // pred_check
      _
    $region23: #{attention_decoder_forward.1} parent=1 // pred_check_branch
      %62 = sbr.rel (0) target = $region25
    $region24: #{attention_decoder_forward.1} parent=1 // pred_region
      %64 = vsyncadd [#allocation10], 0
      %s65 = sshll.u32 %s5, 4
      %s66 = int_to_ptr.hbm [resolvable:$true] %s65
      %s67 = sshll.u32 [#allocation11], 4
      %s68 = int_to_ptr.vmem [resolvable:$true] %s67
      %73 = dma.hbm_to_vmem [thread:$0]  %s66, 3072, %s68, [#allocation10], 192, 192, 12
    $region25: #{attention_decoder_forward.1} parent=1 // pred_fallthru
      _
    // Predicated region
    $region26: #{attention_decoder_forward.1} parent=1 // pred_check
      _
    $region27: #{attention_decoder_forward.1} parent=1 // pred_check_branch
      %75 = sbr.rel (0) target = $region29
    $region28: #{attention_decoder_forward.1} parent=1 // pred_region
      _
    $region29: #{attention_decoder_forward.1} parent=1 // pred_fallthru
      _
    // Predicated region
    $region30: #{attention_decoder_forward.1} parent=1 // pred_check
      _
    $region31: #{attention_decoder_forward.1} parent=1 // pred_check_branch
      %77 = sbr.rel (0) target = $region33
    $region32: #{attention_decoder_forward.1} parent=1 // pred_region
      %79 = vsyncadd [#allocation13], 0
      %s80 = sshll.u32 %s7, 4
      %s81 = int_to_ptr.hbm [resolvable:$true] %s80
      %s82 = sshll.u32 [#allocation12], 4
      %s83 = int_to_ptr.vmem [resolvable:$true] %s82
      %88 = dma.hbm_to_vmem [thread:$0]  %s81, 3072, %s83, [#allocation13], 192, 192, 12
    $region33: #{attention_decoder_forward.1} parent=1 // pred_fallthru
      _
    // Predicated region
    $region34: #{attention_decoder_forward.1} parent=1 // pred_check
      _
    $region35: #{attention_decoder_forward.1} parent=1 // pred_check_branch
      %90 = sbr.rel (0) target = $region37
    $region36: #{attention_decoder_forward.1} parent=1 // pred_region
      _
    $region37: #{attention_decoder_forward.1} parent=1 // pred_fallthru
      _
    // Predicated region
    $region38: #{attention_decoder_forward.1} parent=1 // pred_check
      _
    $region39: #{attention_decoder_forward.1} parent=1 // pred_check_branch
      %92 = sbr.rel (0) target = $region41
    $region40: #{attention_decoder_forward.1} parent=1 // pred_region
      _
    $region41: #{attention_decoder_forward.1} parent=1 // pred_fallthru
      _
    // Predicated region
    $region42: #{attention_decoder_forward.1} parent=1 // pred_check
      _
    $region43: #{attention_decoder_forward.1} parent=1 // pred_check_branch
      %94 = sbr.rel (0) target = $region45
    $region44: #{attention_decoder_forward.1} parent=1 // pred_region
      _
    $region45: #{attention_decoder_forward.1} parent=1 // pred_fallthru
      _
    // Predicated region
    $region46: #{attention_decoder_forward.1} parent=1 // pred_check
      _
    $region47: #{attention_decoder_forward.1} parent=1 // pred_check_branch
      %96 = sbr.rel (0) target = $region49
    $region48: #{attention_decoder_forward.1} parent=1 // pred_region
      %98 = vsyncadd [#allocation13], 0
      %s99 = sshll.u32 %s11, 4
      %s100 = int_to_ptr.hbm [resolvable:$true] %s99
      %s101 = sshll.u32 [#allocation14], 4
      %s102 = int_to_ptr.vmem [resolvable:$true] %s101
      %107 = dma.hbm_to_vmem [thread:$0]  %s100, 4096, %s102, [#allocation13], 256, 256, 16
    $region49: #{attention_decoder_forward.1} parent=1 // pred_fallthru
      _
    // Predicated region
    $region50: #{attention_decoder_forward.1} parent=1 // pred_check
      _
    $region51: #{attention_decoder_forward.1} parent=1 // pred_check_branch
      %109 = sbr.rel (0) target = $region53
    $region52: #{attention_decoder_forward.1} parent=1 // pred_region
      %111 = vsyncadd [#allocation16], 0
      %s112 = sshll.u32 %s12, 4
      %s113 = int_to_ptr.hbm [resolvable:$true] %s112
      %s114 = sshll.u32 [#allocation15], 4
      %s115 = int_to_ptr.vmem [resolvable:$true] %s114
      %120 = dma.hbm_to_vmem [thread:$0]  %s113, 4096, %s115, [#allocation16], 256, 256, 16
    $region53: #{attention_decoder_forward.1} parent=1 // pred_fallthru
      _
    // Predicated region
    $region54: #{attention_decoder_forward.1} parent=1 // pred_check
      _
    $region55: #{attention_decoder_forward.1} parent=1 // pred_check_branch
      %122 = sbr.rel (0) target = $region57
    $region56: #{attention_decoder_forward.1} parent=1 // pred_region
      _
    $region57: #{attention_decoder_forward.1} parent=1 // pred_fallthru
      _
    // Predicated region
    $region58: #{attention_decoder_forward.1} parent=1 // pred_check
      _
    $region59: #{attention_decoder_forward.1} parent=1 // pred_check_branch
      %124 = sbr.rel (0) target = $region61
    $region60: #{attention_decoder_forward.1} parent=1 // pred_region
      %126 = dma.done [#allocation7], 2048
    $region61: #{attention_decoder_forward.1} parent=1 // pred_fallthru
      _
    // Predicated region
    $region62: #{attention_decoder_forward.1} parent=1 // pred_check
      _
    $region63: #{attention_decoder_forward.1} parent=1 // pred_check_branch
      %128 = sbr.rel (0) target = $region65
    $region64: #{attention_decoder_forward.1} parent=1 // pred_region
      %130 = dma.done [#allocation10], 3072
    $region65: #{attention_decoder_forward.1} parent=1 // pred_fallthru
      _
    // Predicated region
    $region66: #{attention_decoder_forward.1} parent=1 // pred_check
      _
    $region67: #{attention_decoder_forward.1} parent=1 // pred_check_branch
      %132 = sbr.rel (0) target = $region69
    $region68: #{attention_decoder_forward.1} parent=1 // pred_region
      %134 = dma.done [#allocation10], 3072
    $region69: #{attention_decoder_forward.1} parent=1 // pred_fallthru
      _
    // Predicated region
    $region70: #{attention_decoder_forward.1} parent=1 // pred_check
      _
    $region71: #{attention_decoder_forward.1} parent=1 // pred_check_branch
      %136 = sbr.rel (0) target = $region73
    $region72: #{attention_decoder_forward.1} parent=1 // pred_region
      %138 = dma.done [#allocation13], 3072
    $region73: #{attention_decoder_forward.1} parent=1 // pred_fallthru
      _
    // Predicated region
    $region74: #{attention_decoder_forward.1} parent=1 // pred_check
      _
    $region75: #{attention_decoder_forward.1} parent=1 // pred_check_branch
      %140 = sbr.rel (0) target = $region77
    $region76: #{attention_decoder_forward.1} parent=1 // pred_region
      %142 = dma.done [#allocation13], 4096
    $region77: #{attention_decoder_forward.1} parent=1 // pred_fallthru
      _
    // Predicated region
    $region78: #{attention_decoder_forward.1} parent=1 // pred_check
      _
    $region79: #{attention_decoder_forward.1} parent=1 // pred_check_branch
      %144 = sbr.rel (0) target = $region81
    $region80: #{attention_decoder_forward.1} parent=1 // pred_region
      %146 = dma.done [#allocation16], 4096
    $region81: #{attention_decoder_forward.1} parent=1 // pred_fallthru
      _
    %p147 = scmp.eq.s32.totalorder 0, 0
    // Predicated region
    $region82: #{attention_decoder_forward.1} parent=1 // pred_check
      %p148 = pneg %p147
    $region83: #{attention_decoder_forward.1} parent=1 // pred_check_branch
      %150 = sbr.rel (%p148) target = $region85
    $region84: #{attention_decoder_forward.1} parent=1 // pred_region
      %v151 = vld [vmem:[%s0] sm:$0xf]
      %v152 = vld [vmem:[%s1] sm:$0xff]
      %v153 = vld [vmem:[%s2] sm:$0xff]
      %v154 = vpack.c.bf16 %v152, %v152
      %v155 = vpack.c.bf16 %v153, %v153
      %v156 = vld [vmem:[#allocation9] sm:$0xff]
      %v157 = vld [vmem:[#allocation9 + $0x8] sm:$0xf]
      %v158 = vld [vmem:[#allocation9 + $0xc] sm:$0xff]
      %v159 = vld [vmem:[#allocation9 + $0x14] sm:$0xf]
      %v160 = vld [vmem:[#allocation9 + $0x18] sm:$0xff]
      %v161 = vld [vmem:[#allocation9 + $0x20] sm:$0xf]
      %v162 = vld [vmem:[#allocation9 + $0x24] sm:$0xff]
      %v163 = vld [vmem:[#allocation9 + $0x2c] sm:$0xf]
      %v164 = vld [vmem:[#allocation9 + $0x30] sm:$0xff]
      %v165 = vld [vmem:[#allocation9 + $0x38] sm:$0xf]
      %v166 = vld [vmem:[#allocation9 + $0x3c] sm:$0xff]
      %v167 = vld [vmem:[#allocation9 + $0x44] sm:$0xf]
      %v168 = vld [vmem:[#allocation9 + $0x48] sm:$0xff]
      %v169 = vld [vmem:[#allocation9 + $0x50] sm:$0xf]
      %v170 = vld [vmem:[#allocation9 + $0x54] sm:$0xff]
      %v171 = vld [vmem:[#allocation9 + $0x5c] sm:$0xf]
      %v172 = vld [vmem:[#allocation9 + $0x60] sm:$0xff]
      %v173 = vld [vmem:[#allocation9 + $0x68] sm:$0xf]
      %v174 = vld [vmem:[#allocation9 + $0x6c] sm:$0xff]
      %v175 = vld [vmem:[#allocation9 + $0x74] sm:$0xf]
      %v176 = vld [vmem:[#allocation9 + $0x78] sm:$0xff]
      %v177 = vld [vmem:[#allocation9 + $0x80] sm:$0xf]
      %v178 = vld [vmem:[#allocation9 + $0x84] sm:$0xff]
      %v179 = vld [vmem:[#allocation9 + $0x8c] sm:$0xf]
      %v180 = vld [vmem:[#allocation9 + $0x90] sm:$0xff]
      %v181 = vld [vmem:[#allocation9 + $0x98] sm:$0xf]
      %v182 = vld [vmem:[#allocation9 + $0x9c] sm:$0xff]
      %v183 = vld [vmem:[#allocation9 + $0xa4] sm:$0xf]
      %v184 = vld [vmem:[#allocation9 + $0xa8] sm:$0xff]
      %v185 = vld [vmem:[#allocation9 + $0xb0] sm:$0xf]
      %v186 = vld [vmem:[#allocation9 + $0xb4] sm:$0xff]
      %v187 = vld [vmem:[#allocation9 + $0xbc] sm:$0xf]
      %v188 = vld [vmem:[#allocation11] sm:$0xff]
      %v189 = vld [vmem:[#allocation11 + $0x8] sm:$0xf]
      %v190 = vld [vmem:[#allocation11 + $0xc] sm:$0xff]
      %v191 = vld [vmem:[#allocation11 + $0x14] sm:$0xf]
      %v192 = vld [vmem:[#allocation11 + $0x18] sm:$0xff]
      %v193 = vld [vmem:[#allocation11 + $0x20] sm:$0xf]
      %v194 = vld [vmem:[#allocation11 + $0x24] sm:$0xff]
      %v195 = vld [vmem:[#allocation11 + $0x2c] sm:$0xf]
      %v196 = vld [vmem:[#allocation11 + $0x30] sm:$0xff]
      %v197 = vld [vmem:[#allocation11 + $0x38] sm:$0xf]
      %v198 = vld [vmem:[#allocation11 + $0x3c] sm:$0xff]
      %v199 = vld [vmem:[#allocation11 + $0x44] sm:$0xf]
      %v200 = vld [vmem:[#allocation11 + $0x48] sm:$0xff]
      %v201 = vld [vmem:[#allocation11 + $0x50] sm:$0xf]
      %v202 = vld [vmem:[#allocation11 + $0x54] sm:$0xff]
      %v203 = vld [vmem:[#allocation11 + $0x5c] sm:$0xf]
      %v204 = vld [vmem:[#allocation11 + $0x60] sm:$0xff]
      %v205 = vld [vmem:[#allocation11 + $0x68] sm:$0xf]
      %v206 = vld [vmem:[#allocation11 + $0x6c] sm:$0xff]
      %v207 = vld [vmem:[#allocation11 + $0x74] sm:$0xf]
      %v208 = vld [vmem:[#allocation11 + $0x78] sm:$0xff]
      %v209 = vld [vmem:[#allocation11 + $0x80] sm:$0xf]
      %v210 = vld [vmem:[#allocation11 + $0x84] sm:$0xff]
      %v211 = vld [vmem:[#allocation11 + $0x8c] sm:$0xf]
      %v212 = vld [vmem:[#allocation11 + $0x90] sm:$0xff]
      %v213 = vld [vmem:[#allocation11 + $0x98] sm:$0xf]
      %v214 = vld [vmem:[#allocation11 + $0x9c] sm:$0xff]
      %v215 = vld [vmem:[#allocation11 + $0xa4] sm:$0xf]
      %v216 = vld [vmem:[#allocation11 + $0xa8] sm:$0xff]
      %v217 = vld [vmem:[#allocation11 + $0xb0] sm:$0xf]
      %v218 = vld [vmem:[#allocation11 + $0xb4] sm:$0xff]
      %v219 = vld [vmem:[#allocation11 + $0xbc] sm:$0xf]
      %v252 = vunpack.c.l.b16 %v188
      %v253 = vunpack.c.h.b16 %v188
      %v254 = vunpack.c.l.b16 %v189
      %v255 = vunpack.c.l.b16 %v190
      %v256 = vunpack.c.h.b16 %v190
      %v257 = vunpack.c.l.b16 %v191
      %v258 = vunpack.c.l.b16 %v192
      %v259 = vunpack.c.h.b16 %v192
      %v260 = vunpack.c.l.b16 %v193
      %v261 = vunpack.c.l.b16 %v194
      %v262 = vunpack.c.h.b16 %v194
      %v263 = vunpack.c.l.b16 %v195
      %v264 = vunpack.c.l.b16 %v196
      %v265 = vunpack.c.h.b16 %v196
      %v266 = vunpack.c.l.b16 %v197
      %v267 = vunpack.c.l.b16 %v198
      %v268 = vunpack.c.h.b16 %v198
      %v269 = vunpack.c.l.b16 %v199
      %v270 = vunpack.c.l.b16 %v200
      %v271 = vunpack.c.h.b16 %v200
      %v272 = vunpack.c.l.b16 %v201
      %v273 = vunpack.c.l.b16 %v202
      %v274 = vunpack.c.h.b16 %v202
      %v275 = vunpack.c.l.b16 %v203
      %v276 = vunpack.c.l.b16 %v204
      %v277 = vunpack.c.h.b16 %v204
      %v278 = vunpack.c.l.b16 %v205
      %v279 = vunpack.c.l.b16 %v206
      %v280 = vunpack.c.h.b16 %v206
      %v281 = vunpack.c.l.b16 %v207
      %v282 = vunpack.c.l.b16 %v208
      %v283 = vunpack.c.h.b16 %v208
      %v284 = vunpack.c.l.b16 %v209
      %v285 = vunpack.c.l.b16 %v210
      %v286 = vunpack.c.h.b16 %v210
      %v287 = vunpack.c.l.b16 %v211
      %v288 = vunpack.c.l.b16 %v212
      %v289 = vunpack.c.h.b16 %v212
      %v290 = vunpack.c.l.b16 %v213
      %v291 = vunpack.c.l.b16 %v214
      %v292 = vunpack.c.h.b16 %v214
      %v293 = vunpack.c.l.b16 %v215
      %v294 = vunpack.c.l.b16 %v216
      %v295 = vunpack.c.h.b16 %v216
      %v296 = vunpack.c.l.b16 %v217
      %v297 = vunpack.c.l.b16 %v218
      %v298 = vunpack.c.h.b16 %v218
      %v299 = vunpack.c.l.b16 %v219
      %v300 = vpack.c.b16 %v255, %v252
      %v301 = vpack.c.b16 %v256, %v253
      %v302 = vpack.c.b16 %v257, %v254
      %v303 = vpack.c.b16 %v261, %v258
      %v304 = vpack.c.b16 %v262, %v259
      %v305 = vpack.c.b16 %v263, %v260
      %v306 = vpack.c.b16 %v267, %v264
      %v307 = vpack.c.b16 %v268, %v265
      %v308 = vpack.c.b16 %v269, %v266
      %v309 = vpack.c.b16 %v273, %v270
      %v310 = vpack.c.b16 %v274, %v271
      %v311 = vpack.c.b16 %v275, %v272
      %v312 = vpack.c.b16 %v279, %v276
      %v313 = vpack.c.b16 %v280, %v277
      %v314 = vpack.c.b16 %v281, %v278
      %v315 = vpack.c.b16 %v285, %v282
      %v316 = vpack.c.b16 %v286, %v283
      %v317 = vpack.c.b16 %v287, %v284
      %v318 = vpack.c.b16 %v291, %v288
      %v319 = vpack.c.b16 %v292, %v289
      %v320 = vpack.c.b16 %v293, %v290
      %v321 = vpack.c.b16 %v297, %v294
      %v322 = vpack.c.b16 %v298, %v295
      %v323 = vpack.c.b16 %v299, %v296
      %348 = vmatpush.bf16.msra.mxu0 %v321
      %349 = vmatpush.bf16.msra.mxu0 %v318
      %350 = vmatpush.bf16.msra.mxu0 %v315
      %351 = vmatpush.bf16.msra.mxu0 %v312
      %352 = vmatpush.bf16.msra.mxu0 %v309
      %353 = vmatpush.bf16.msra.mxu0 %v306
      %354 = vmatpush.bf16.msra.mxu0 %v303
      %355 = vmatpush.bf16.msra.mxu0 %v300
      %356 = vmatmul.bf16.gmra.mxu0 %v154
      %v357 = vpop.f32.mrf.mxu0
      %v358 = vadd.f32 0.0, %v357
      %v359 = vpop.f32.mrf.mxu0
      %360 = vdwg.mxu0
      %361 = vmatpush.bf16.msra.mxu0 %v322
      %362 = vmatpush.bf16.msra.mxu0 %v319
      %363 = vmatpush.bf16.msra.mxu0 %v316
      %364 = vmatpush.bf16.msra.mxu0 %v313
      %365 = vmatpush.bf16.msra.mxu0 %v310
      %366 = vmatpush.bf16.msra.mxu0 %v307
      %367 = vmatpush.bf16.msra.mxu0 %v304
      %368 = vmatpush.bf16.msra.mxu0 %v301
      %369 = vmatmul.bf16.gmra.mxu0 %v154
      %v370 = vpop.f32.mrf.mxu0
      %v371 = vadd.f32 0.0, %v370
      %v372 = vpop.f32.mrf.mxu0
      %373 = vdwg.mxu0
      %374 = vmatpush.bf16.msra.mxu0 %v323
      %375 = vmatpush.bf16.msra.mxu0 %v320
      %376 = vmatpush.bf16.msra.mxu0 %v317
      %377 = vmatpush.bf16.msra.mxu0 %v314
      %378 = vmatpush.bf16.msra.mxu0 %v311
      %379 = vmatpush.bf16.msra.mxu0 %v308
      %380 = vmatpush.bf16.msra.mxu0 %v305
      %381 = vmatpush.bf16.msra.mxu0 %v302
      %382 = vmatmul.bf16.gmra.mxu0 %v154
      %v383 = vpop.f32.mrf.mxu0
      %v384 = vadd.f32 0.0, %v383
      %v385 = vpop.f32.mrf.mxu0
      %386 = vdwg.mxu0
      %v419 = vunpack.c.l.b16 %v156
      %v420 = vunpack.c.h.b16 %v156
      %v421 = vunpack.c.l.b16 %v157
      %v422 = vunpack.c.l.b16 %v158
      %v423 = vunpack.c.h.b16 %v158
      %v424 = vunpack.c.l.b16 %v159
      %v425 = vunpack.c.l.b16 %v160
      %v426 = vunpack.c.h.b16 %v160
      %v427 = vunpack.c.l.b16 %v161
      %v428 = vunpack.c.l.b16 %v162
      %v429 = vunpack.c.h.b16 %v162
      %v430 = vunpack.c.l.b16 %v163
      %v431 = vunpack.c.l.b16 %v164
      %v432 = vunpack.c.h.b16 %v164
      %v433 = vunpack.c.l.b16 %v165
      %v434 = vunpack.c.l.b16 %v166
      %v435 = vunpack.c.h.b16 %v166
      %v436 = vunpack.c.l.b16 %v167
      %v437 = vunpack.c.l.b16 %v168
      %v438 = vunpack.c.h.b16 %v168
      %v439 = vunpack.c.l.b16 %v169
      %v440 = vunpack.c.l.b16 %v170
      %v441 = vunpack.c.h.b16 %v170
      %v442 = vunpack.c.l.b16 %v171
      %v443 = vunpack.c.l.b16 %v172
      %v444 = vunpack.c.h.b16 %v172
      %v445 = vunpack.c.l.b16 %v173
      %v446 = vunpack.c.l.b16 %v174
      %v447 = vunpack.c.h.b16 %v174
      %v448 = vunpack.c.l.b16 %v175
      %v449 = vunpack.c.l.b16 %v176
      %v450 = vunpack.c.h.b16 %v176
      %v451 = vunpack.c.l.b16 %v177
      %v452 = vunpack.c.l.b16 %v178
      %v453 = vunpack.c.h.b16 %v178
      %v454 = vunpack.c.l.b16 %v179
      %v455 = vunpack.c.l.b16 %v180
      %v456 = vunpack.c.h.b16 %v180
      %v457 = vunpack.c.l.b16 %v181
      %v458 = vunpack.c.l.b16 %v182
      %v459 = vunpack.c.h.b16 %v182
      %v460 = vunpack.c.l.b16 %v183
      %v461 = vunpack.c.l.b16 %v184
      %v462 = vunpack.c.h.b16 %v184
      %v463 = vunpack.c.l.b16 %v185
      %v464 = vunpack.c.l.b16 %v186
      %v465 = vunpack.c.h.b16 %v186
      %v466 = vunpack.c.l.b16 %v187
      %v467 = vpack.c.b16 %v422, %v419
      %v468 = vpack.c.b16 %v423, %v420
      %v469 = vpack.c.b16 %v424, %v421
      %v470 = vpack.c.b16 %v428, %v425
      %v471 = vpack.c.b16 %v429, %v426
      %v472 = vpack.c.b16 %v430, %v427
      %v473 = vpack.c.b16 %v434, %v431
      %v474 = vpack.c.b16 %v435, %v432
      %v475 = vpack.c.b16 %v436, %v433
      %v476 = vpack.c.b16 %v440, %v437
      %v477 = vpack.c.b16 %v441, %v438
      %v478 = vpack.c.b16 %v442, %v439
      %v479 = vpack.c.b16 %v446, %v443
      %v480 = vpack.c.b16 %v447, %v444
      %v481 = vpack.c.b16 %v448, %v445
      %v482 = vpack.c.b16 %v452, %v449
      %v483 = vpack.c.b16 %v453, %v450
      %v484 = vpack.c.b16 %v454, %v451
      %v485 = vpack.c.b16 %v458, %v455
      %v486 = vpack.c.b16 %v459, %v456
      %v487 = vpack.c.b16 %v460, %v457
      %v488 = vpack.c.b16 %v464, %v461
      %v489 = vpack.c.b16 %v465, %v462
      %v490 = vpack.c.b16 %v466, %v463
      %515 = vmatpush.bf16.msra.mxu0 %v488
      %516 = vmatpush.bf16.msra.mxu0 %v485
      %517 = vmatpush.bf16.msra.mxu0 %v482
      %518 = vmatpush.bf16.msra.mxu0 %v479
      %519 = vmatpush.bf16.msra.mxu0 %v476
      %520 = vmatpush.bf16.msra.mxu0 %v473
      %521 = vmatpush.bf16.msra.mxu0 %v470
      %522 = vmatpush.bf16.msra.mxu0 %v467
      %523 = vmatmul.bf16.gmra.mxu0 %v151
      %v524 = vpop.f32.mrf.mxu0
      %v525 = vadd.f32 %v358, %v524
      %v526 = vpop.f32.mrf.mxu0
      %527 = vdwg.mxu0
      %528 = vmatpush.bf16.msra.mxu0 %v489
      %529 = vmatpush.bf16.msra.mxu0 %v486
      %530 = vmatpush.bf16.msra.mxu0 %v483
      %531 = vmatpush.bf16.msra.mxu0 %v480
      %532 = vmatpush.bf16.msra.mxu0 %v477
      %533 = vmatpush.bf16.msra.mxu0 %v474
      %534 = vmatpush.bf16.msra.mxu0 %v471
      %535 = vmatpush.bf16.msra.mxu0 %v468
      %536 = vmatmul.bf16.gmra.mxu0 %v151
      %v537 = vpop.f32.mrf.mxu0
      %v538 = vadd.f32 %v371, %v537
      %v539 = vpop.f32.mrf.mxu0
      %540 = vdwg.mxu0
      %541 = vmatpush.bf16.msra.mxu0 %v490
      %542 = vmatpush.bf16.msra.mxu0 %v487
      %543 = vmatpush.bf16.msra.mxu0 %v484
      %544 = vmatpush.bf16.msra.mxu0 %v481
      %545 = vmatpush.bf16.msra.mxu0 %v478
      %546 = vmatpush.bf16.msra.mxu0 %v475
      %547 = vmatpush.bf16.msra.mxu0 %v472
      %548 = vmatpush.bf16.msra.mxu0 %v469
      %549 = vmatmul.bf16.gmra.mxu0 %v151
      %v550 = vpop.f32.mrf.mxu0
      %v551 = vadd.f32 %v384, %v550
      %v552 = vpop.f32.mrf.mxu0
      %553 = vdwg.mxu0
      %v554 = vld [vmem:[%s6] sm:$0x7]
      %v556 = vperm.slane %v554, 0
      %v557 = vperm.slane %v554, 1
      %v558 = vperm.slane %v554, 2
      %v562 = vadd.f32 %v525, %v556
      %v563 = vadd.f32 %v538, %v557
      %v564 = vadd.f32 %v551, %v558
      %v565 = vld [vmem:[#allocation12] sm:$0xff]
      %v566 = vld [vmem:[#allocation12 + $0x8] sm:$0xf]
      %v567 = vld [vmem:[#allocation12 + $0xc] sm:$0xff]
      %v568 = vld [vmem:[#allocation12 + $0x14] sm:$0xf]
      %v569 = vld [vmem:[#allocation12 + $0x18] sm:$0xff]
      %v570 = vld [vmem:[#allocation12 + $0x20] sm:$0xf]
      %v571 = vld [vmem:[#allocation12 + $0x24] sm:$0xff]
      %v572 = vld [vmem:[#allocation12 + $0x2c] sm:$0xf]
      %v573 = vld [vmem:[#allocation12 + $0x30] sm:$0xff]
      %v574 = vld [vmem:[#allocation12 + $0x38] sm:$0xf]
      %v575 = vld [vmem:[#allocation12 + $0x3c] sm:$0xff]
      %v576 = vld [vmem:[#allocation12 + $0x44] sm:$0xf]
      %v577 = vld [vmem:[#allocation12 + $0x48] sm:$0xff]
      %v578 = vld [vmem:[#allocation12 + $0x50] sm:$0xf]
      %v579 = vld [vmem:[#allocation12 + $0x54] sm:$0xff]
      %v580 = vld [vmem:[#allocation12 + $0x5c] sm:$0xf]
      %v581 = vld [vmem:[#allocation12 + $0x60] sm:$0xff]
      %v582 = vld [vmem:[#allocation12 + $0x68] sm:$0xf]
      %v583 = vld [vmem:[#allocation12 + $0x6c] sm:$0xff]
      %v584 = vld [vmem:[#allocation12 + $0x74] sm:$0xf]
      %v585 = vld [vmem:[#allocation12 + $0x78] sm:$0xff]
      %v586 = vld [vmem:[#allocation12 + $0x80] sm:$0xf]
      %v587 = vld [vmem:[#allocation12 + $0x84] sm:$0xff]
      %v588 = vld [vmem:[#allocation12 + $0x8c] sm:$0xf]
      %v589 = vld [vmem:[#allocation12 + $0x90] sm:$0xff]
      %v590 = vld [vmem:[#allocation12 + $0x98] sm:$0xf]
      %v591 = vld [vmem:[#allocation12 + $0x9c] sm:$0xff]
      %v592 = vld [vmem:[#allocation12 + $0xa4] sm:$0xf]
      %v593 = vld [vmem:[#allocation12 + $0xa8] sm:$0xff]
      %v594 = vld [vmem:[#allocation12 + $0xb0] sm:$0xf]
      %v595 = vld [vmem:[#allocation12 + $0xb4] sm:$0xff]
      %v596 = vld [vmem:[#allocation12 + $0xbc] sm:$0xf]
      %v597 = vld [vmem:[%s8] sm:$0x7]
      %v599 = vperm.slane %v597, 0
      %v600 = vperm.slane %v597, 1
      %v601 = vperm.slane %v597, 2
      %v637 = vunpack.c.l.b16 %v565
      %v638 = vunpack.c.h.b16 %v565
      %v639 = vunpack.c.l.b16 %v566
      %v640 = vunpack.c.l.b16 %v567
      %v641 = vunpack.c.h.b16 %v567
      %v642 = vunpack.c.l.b16 %v568
      %v643 = vunpack.c.l.b16 %v569
      %v644 = vunpack.c.h.b16 %v569
      %v645 = vunpack.c.l.b16 %v570
      %v646 = vunpack.c.l.b16 %v571
      %v647 = vunpack.c.h.b16 %v571
      %v648 = vunpack.c.l.b16 %v572
      %v649 = vunpack.c.l.b16 %v573
      %v650 = vunpack.c.h.b16 %v573
      %v651 = vunpack.c.l.b16 %v574
      %v652 = vunpack.c.l.b16 %v575
      %v653 = vunpack.c.h.b16 %v575
      %v654 = vunpack.c.l.b16 %v576
      %v655 = vunpack.c.l.b16 %v577
      %v656 = vunpack.c.h.b16 %v577
      %v657 = vunpack.c.l.b16 %v578
      %v658 = vunpack.c.l.b16 %v579
      %v659 = vunpack.c.h.b16 %v579
      %v660 = vunpack.c.l.b16 %v580
      %v661 = vunpack.c.l.b16 %v581
      %v662 = vunpack.c.h.b16 %v581
      %v663 = vunpack.c.l.b16 %v582
      %v664 = vunpack.c.l.b16 %v583
      %v665 = vunpack.c.h.b16 %v583
      %v666 = vunpack.c.l.b16 %v584
      %v667 = vunpack.c.l.b16 %v585
      %v668 = vunpack.c.h.b16 %v585
      %v669 = vunpack.c.l.b16 %v586
      %v670 = vunpack.c.l.b16 %v587
      %v671 = vunpack.c.h.b16 %v587
      %v672 = vunpack.c.l.b16 %v588
      %v673 = vunpack.c.l.b16 %v589
      %v674 = vunpack.c.h.b16 %v589
      %v675 = vunpack.c.l.b16 %v590
      %v676 = vunpack.c.l.b16 %v591
      %v677 = vunpack.c.h.b16 %v591
      %v678 = vunpack.c.l.b16 %v592
      %v679 = vunpack.c.l.b16 %v593
      %v680 = vunpack.c.h.b16 %v593
      %v681 = vunpack.c.l.b16 %v594
      %v682 = vunpack.c.l.b16 %v595
      %v683 = vunpack.c.h.b16 %v595
      %v684 = vunpack.c.l.b16 %v596
      %v685 = vpack.c.b16 %v640, %v637
      %v686 = vpack.c.b16 %v641, %v638
      %v687 = vpack.c.b16 %v642, %v639
      %v688 = vpack.c.b16 %v646, %v643
      %v689 = vpack.c.b16 %v647, %v644
      %v690 = vpack.c.b16 %v648, %v645
      %v691 = vpack.c.b16 %v652, %v649
      %v692 = vpack.c.b16 %v653, %v650
      %v693 = vpack.c.b16 %v654, %v651
      %v694 = vpack.c.b16 %v658, %v655
      %v695 = vpack.c.b16 %v659, %v656
      %v696 = vpack.c.b16 %v660, %v657
      %v697 = vpack.c.b16 %v664, %v661
      %v698 = vpack.c.b16 %v665, %v662
      %v699 = vpack.c.b16 %v666, %v663
      %v700 = vpack.c.b16 %v670, %v667
      %v701 = vpack.c.b16 %v671, %v668
      %v702 = vpack.c.b16 %v672, %v669
      %v703 = vpack.c.b16 %v676, %v673
      %v704 = vpack.c.b16 %v677, %v674
      %v705 = vpack.c.b16 %v678, %v675
      %v706 = vpack.c.b16 %v682, %v679
      %v707 = vpack.c.b16 %v683, %v680
      %v708 = vpack.c.b16 %v684, %v681
      %733 = vmatpush.bf16.msra.mxu0 %v706
      %734 = vmatpush.bf16.msra.mxu0 %v703
      %735 = vmatpush.bf16.msra.mxu0 %v700
      %736 = vmatpush.bf16.msra.mxu0 %v697
      %737 = vmatpush.bf16.msra.mxu0 %v694
      %738 = vmatpush.bf16.msra.mxu0 %v691
      %739 = vmatpush.bf16.msra.mxu0 %v688
      %740 = vmatpush.bf16.msra.mxu0 %v685
      %741 = vmatmul.bf16.gmra.mxu0 %v155
      %v742 = vpop.f32.mrf.mxu0
      %v743 = vadd.f32 %v599, %v742
      %v744 = vpop.f32.mrf.mxu0
      %745 = vdwg.mxu0
      %746 = vmatpush.bf16.msra.mxu0 %v707
      %747 = vmatpush.bf16.msra.mxu0 %v704
      %748 = vmatpush.bf16.msra.mxu0 %v701
      %749 = vmatpush.bf16.msra.mxu0 %v698
      %750 = vmatpush.bf16.msra.mxu0 %v695
      %751 = vmatpush.bf16.msra.mxu0 %v692
      %752 = vmatpush.bf16.msra.mxu0 %v689
      %753 = vmatpush.bf16.msra.mxu0 %v686
      %754 = vmatmul.bf16.gmra.mxu0 %v155
      %v755 = vpop.f32.mrf.mxu0
      %v756 = vadd.f32 %v600, %v755
      %v757 = vpop.f32.mrf.mxu0
      %758 = vdwg.mxu0
      %759 = vmatpush.bf16.msra.mxu0 %v708
      %760 = vmatpush.bf16.msra.mxu0 %v705
      %761 = vmatpush.bf16.msra.mxu0 %v702
      %762 = vmatpush.bf16.msra.mxu0 %v699
      %763 = vmatpush.bf16.msra.mxu0 %v696
      %764 = vmatpush.bf16.msra.mxu0 %v693
      %765 = vmatpush.bf16.msra.mxu0 %v690
      %766 = vmatpush.bf16.msra.mxu0 %v687
      %767 = vmatmul.bf16.gmra.mxu0 %v155
      %v768 = vpop.f32.mrf.mxu0
      %v769 = vadd.f32 %v601, %v768
      %v770 = vpop.f32.mrf.mxu0
      %771 = vdwg.mxu0
      %v772 = vadd.f32 %v562, %v743
      %v773 = vxor.u32 %v772, 2147483648
      %v774 = vmul.f32 %v773, 1.442695
      %v775 = vpow.pop %v774
      %v776 = vadd.f32 %v775, 1.0
      %v777 = vrcp.pop %v776
      %v778 = vmul.f32 %v776, %v777
      %v779 = vsub.f32 1.0, %v778
      %v780 = vmul.f32 %v777, %v779
      %v781 = vadd.f32 %v777, %v780
      %vm782 = vweird.f32 %v776
      %vm783 = vweird.f32 %v777
      %vm784 = vmor %vm782, %vm783
      %v785 = vsel %vm784, %v777, %v781
      %v786 = vand.u32 2147483647, %v776
      %vm787 = vcmp.eq.f32.partialorder %v786, 8.507059e+37
      %v788 = vand.u32 %v776, 2147483648
      %v789 = vor.u32 1.1754944e-38, %v788
      %v790 = vsel %vm787, %v789, %v785
      %v791 = vmul.f32 1.0, %v790
      %v792 = vadd.f32 %v563, %v756
      %v793 = vxor.u32 %v792, 2147483648
      %v794 = vmul.f32 %v793, 1.442695
      %v795 = vpow.pop %v794
      %v796 = vadd.f32 %v795, 1.0
      %v797 = vrcp.pop %v796
      %v798 = vmul.f32 %v796, %v797
      %v799 = vsub.f32 1.0, %v798
      %v800 = vmul.f32 %v797, %v799
      %v801 = vadd.f32 %v797, %v800
      %vm802 = vweird.f32 %v796
      %vm803 = vweird.f32 %v797
      %vm804 = vmor %vm802, %vm803
      %v805 = vsel %vm804, %v797, %v801
      %v806 = vand.u32 2147483647, %v796
      %vm807 = vcmp.eq.f32.partialorder %v806, 8.507059e+37
      %v808 = vand.u32 %v796, 2147483648
      %v809 = vor.u32 1.1754944e-38, %v808
      %v810 = vsel %vm807, %v809, %v805
      %v811 = vmul.f32 1.0, %v810
      %v812 = vmul.f32 %v791, %v769
      %v813 = vadd.f32 %v564, %v812
      %v814 = vtanh.pop %v813
      %v815 = vsub.f32 1.0, %v811
      %v816 = vmul.f32 %v815, %v814
      %v817 = vmul.f32 %v811, %v153
      %v818 = vadd.f32 %v816, %v817
      %v819 = vld [vmem:[#allocation6] sm:$0xff]
      %v820 = vld [vmem:[#allocation6 + $0x8] sm:$0xff]
      %v821 = vld [vmem:[#allocation6 + $0x10] sm:$0xff]
      %v822 = vld [vmem:[#allocation6 + $0x18] sm:$0xff]
      %v823 = vld [vmem:[#allocation6 + $0x20] sm:$0xff]
      %v824 = vld [vmem:[#allocation6 + $0x28] sm:$0xff]
      %v825 = vld [vmem:[#allocation6 + $0x30] sm:$0xff]
      %v826 = vld [vmem:[#allocation6 + $0x38] sm:$0xff]
      %v827 = vld [vmem:[#allocation6 + $0x40] sm:$0xff]
      %v828 = vld [vmem:[#allocation6 + $0x48] sm:$0xff]
      %v829 = vld [vmem:[#allocation6 + $0x50] sm:$0xff]
      %v830 = vld [vmem:[#allocation6 + $0x58] sm:$0xff]
      %v831 = vld [vmem:[#allocation6 + $0x60] sm:$0xff]
      %v832 = vld [vmem:[#allocation6 + $0x68] sm:$0xff]
      %v833 = vld [vmem:[#allocation6 + $0x70] sm:$0xff]
      %v834 = vld [vmem:[#allocation6 + $0x78] sm:$0xff]
      %v835 = vpack.c.bf16 %v818, %v818
      %v836 = vld [vmem:[%s9] sm:$0xf]
      %v837 = vld [vmem:[%s9 + $0x4] sm:$0xf]
      %v838 = vld [vmem:[%s9 + $0x8] sm:$0xf]
      %v839 = vld [vmem:[%s9 + $0xc] sm:$0xf]
      %v840 = vld [vmem:[%s9 + $0x10] sm:$0xf]
      %v841 = vld [vmem:[%s9 + $0x14] sm:$0xf]
      %v842 = vld [vmem:[%s9 + $0x18] sm:$0xf]
      %v843 = vld [vmem:[%s9 + $0x1c] sm:$0xf]
      %v844 = vld [vmem:[%s9 + $0x20] sm:$0xf]
      %v845 = vld [vmem:[%s9 + $0x24] sm:$0xf]
      %v846 = vld [vmem:[%s9 + $0x28] sm:$0xf]
      %v847 = vld [vmem:[%s9 + $0x2c] sm:$0xf]
      %v848 = vld [vmem:[%s9 + $0x30] sm:$0xf]
      %v849 = vld [vmem:[%s9 + $0x34] sm:$0xf]
      %v850 = vld [vmem:[%s9 + $0x38] sm:$0xf]
      %v851 = vld [vmem:[%s9 + $0x3c] sm:$0xf]
      %v868 = vunpack.c.l.b16 %v836
      %v869 = vunpack.c.l.b16 %v837
      %v870 = vunpack.c.l.b16 %v838
      %v871 = vunpack.c.l.b16 %v839
      %v872 = vunpack.c.l.b16 %v840
      %v873 = vunpack.c.l.b16 %v841
      %v874 = vunpack.c.l.b16 %v842
      %v875 = vunpack.c.l.b16 %v843
      %v876 = vunpack.c.l.b16 %v844
      %v877 = vunpack.c.l.b16 %v845
      %v878 = vunpack.c.l.b16 %v846
      %v879 = vunpack.c.l.b16 %v847
      %v880 = vunpack.c.l.b16 %v848
      %v881 = vunpack.c.l.b16 %v849
      %v882 = vunpack.c.l.b16 %v850
      %v883 = vunpack.c.l.b16 %v851
      %v884 = vpack.c.b16 %v869, %v868
      %v885 = vpack.c.b16 %v871, %v870
      %v886 = vpack.c.b16 %v873, %v872
      %v887 = vpack.c.b16 %v875, %v874
      %v888 = vpack.c.b16 %v877, %v876
      %v889 = vpack.c.b16 %v879, %v878
      %v890 = vpack.c.b16 %v881, %v880
      %v891 = vpack.c.b16 %v883, %v882
      %900 = vmatpush.bf16.msra.mxu0 %v891
      %901 = vmatpush.bf16.msra.mxu0 %v890
      %902 = vmatpush.bf16.msra.mxu0 %v889
      %903 = vmatpush.bf16.msra.mxu0 %v888
      %904 = vmatpush.bf16.msra.mxu0 %v887
      %905 = vmatpush.bf16.msra.mxu0 %v886
      %906 = vmatpush.bf16.msra.mxu0 %v885
      %907 = vmatpush.bf16.msra.mxu0 %v884
      %908 = vmatmul.bf16.gmra.mxu0 %v835
      %v909 = vpop.f32.mrf.mxu0
      %v910 = vadd.f32 0.0, %v909
      %v911 = vpop.f32.mrf.mxu0
      %912 = vdwg.mxu0
      %v913 = vld [vmem:[%s10] sm:$0x1]
      %v915 = vperm.slane %v913, 0
      %v917 = vmul.f32 %v818, %v915
      %918 = vadd.xlane.f32.xlu0 %v917
      %v919 = vpop.xlane.xlu0 %918
      %v921 = vrot.slane %v910, 1
      %v922 = vrot.slane %v910, 2
      %v923 = vrot.slane %v910, 3
      %v924 = vrot.slane %v910, 4
      %v925 = vrot.slane %v910, 5
      %v926 = vrot.slane %v910, 6
      %v927 = vrot.slane %v910, 7
      %v928 = vperm.slane %v910, 0
      %v929 = vperm.slane %v921, 0
      %v930 = vperm.slane %v922, 0
      %v931 = vperm.slane %v923, 0
      %v932 = vperm.slane %v924, 0
      %v933 = vperm.slane %v925, 0
      %v934 = vperm.slane %v926, 0
      %v935 = vperm.slane %v927, 0
      %v944 = vmul.f32 %v928, %v819
      %v945 = vmul.f32 %v928, %v820
      %v946 = vmul.f32 %v929, %v821
      %v947 = vmul.f32 %v929, %v822
      %v948 = vmul.f32 %v930, %v823
      %v949 = vmul.f32 %v930, %v824
      %v950 = vmul.f32 %v931, %v825
      %v951 = vmul.f32 %v931, %v826
      %v952 = vmul.f32 %v932, %v827
      %v953 = vmul.f32 %v932, %v828
      %v954 = vmul.f32 %v933, %v829
      %v955 = vmul.f32 %v933, %v830
      %v956 = vmul.f32 %v934, %v831
      %v957 = vmul.f32 %v934, %v832
      %v958 = vmul.f32 %v935, %v833
      %v959 = vmul.f32 %v935, %v834
      %960 = vadd.xlane.f32.xlu0 %v944
      %v961 = vpop.xlane.xlu0 %960
      %962 = vadd.xlane.f32.xlu0 %v945
      %v963 = vpop.xlane.xlu0 %962
      %964 = vadd.xlane.f32.xlu0 %v946
      %v965 = vpop.xlane.xlu0 %964
      %966 = vadd.xlane.f32.xlu0 %v947
      %v967 = vpop.xlane.xlu0 %966
      %968 = vadd.xlane.f32.xlu0 %v948
      %v969 = vpop.xlane.xlu0 %968
      %970 = vadd.xlane.f32.xlu0 %v949
      %v971 = vpop.xlane.xlu0 %970
      %972 = vadd.xlane.f32.xlu0 %v950
      %v973 = vpop.xlane.xlu0 %972
      %974 = vadd.xlane.f32.xlu0 %v951
      %v975 = vpop.xlane.xlu0 %974
      %976 = vadd.xlane.f32.xlu0 %v952
      %v977 = vpop.xlane.xlu0 %976
      %978 = vadd.xlane.f32.xlu0 %v953
      %v979 = vpop.xlane.xlu0 %978
      %980 = vadd.xlane.f32.xlu0 %v954
      %v981 = vpop.xlane.xlu0 %980
      %982 = vadd.xlane.f32.xlu0 %v955
      %v983 = vpop.xlane.xlu0 %982
      %984 = vadd.xlane.f32.xlu0 %v956
      %v985 = vpop.xlane.xlu0 %984
      %986 = vadd.xlane.f32.xlu0 %v957
      %v987 = vpop.xlane.xlu0 %986
      %988 = vadd.xlane.f32.xlu0 %v958
      %v989 = vpop.xlane.xlu0 %988
      %990 = vadd.xlane.f32.xlu0 %v959
      %v991 = vpop.xlane.xlu0 %990
      %v993 = vperm.slane %v919, 0
      %v994 = vperm.slane %v919, 1
      %v995 = vperm.slane %v919, 2
      %v996 = vperm.slane %v919, 3
      %v997 = vperm.slane %v919, 4
      %v998 = vperm.slane %v919, 5
      %v999 = vperm.slane %v919, 6
      %v1000 = vperm.slane %v919, 7
      %v1009 = vadd.f32 %v961, %v993
      %v1010 = vadd.f32 %v963, %v993
      %v1011 = vadd.f32 %v965, %v994
      %v1012 = vadd.f32 %v967, %v994
      %v1013 = vadd.f32 %v969, %v995
      %v1014 = vadd.f32 %v971, %v995
      %v1015 = vadd.f32 %v973, %v996
      %v1016 = vadd.f32 %v975, %v996
      %v1017 = vadd.f32 %v977, %v997
      %v1018 = vadd.f32 %v979, %v997
      %v1019 = vadd.f32 %v981, %v998
      %v1020 = vadd.f32 %v983, %v998
      %v1021 = vadd.f32 %v985, %v999
      %v1022 = vadd.f32 %v987, %v999
      %v1023 = vadd.f32 %v989, %v1000
      %v1024 = vadd.f32 %v991, %v1000
      %1041 = vset.pattern.permute.xlu0 0
      %1042 = vperm.xlu0 %1041, %v1009
      %v1043 = vpop.permute.xlu0 %1042
      %1044 = vset.pattern.permute.xlu0 0
      %1045 = vperm.xlu0 %1044, %v1010
      %v1046 = vpop.permute.xlu0 %1045
      %1047 = vset.pattern.permute.xlu0 0
      %1048 = vperm.xlu0 %1047, %v1011
      %v1049 = vpop.permute.xlu0 %1048
      %1050 = vset.pattern.permute.xlu0 0
      %1051 = vperm.xlu0 %1050, %v1012
      %v1052 = vpop.permute.xlu0 %1051
      %1053 = vset.pattern.permute.xlu0 0
      %1054 = vperm.xlu0 %1053, %v1013
      %v1055 = vpop.permute.xlu0 %1054
      %1056 = vset.pattern.permute.xlu0 0
      %1057 = vperm.xlu0 %1056, %v1014
      %v1058 = vpop.permute.xlu0 %1057
      %1059 = vset.pattern.permute.xlu0 0
      %1060 = vperm.xlu0 %1059, %v1015
      %v1061 = vpop.permute.xlu0 %1060
      %1062 = vset.pattern.permute.xlu0 0
      %1063 = vperm.xlu0 %1062, %v1016
      %v1064 = vpop.permute.xlu0 %1063
      %1065 = vset.pattern.permute.xlu0 0
      %1066 = vperm.xlu0 %1065, %v1017
      %v1067 = vpop.permute.xlu0 %1066
      %1068 = vset.pattern.permute.xlu0 0
      %1069 = vperm.xlu0 %1068, %v1018
      %v1070 = vpop.permute.xlu0 %1069
      %1071 = vset.pattern.permute.xlu0 0
      %1072 = vperm.xlu0 %1071, %v1019
      %v1073 = vpop.permute.xlu0 %1072
      %1074 = vset.pattern.permute.xlu0 0
      %1075 = vperm.xlu0 %1074, %v1020
      %v1076 = vpop.permute.xlu0 %1075
      %1077 = vset.pattern.permute.xlu0 0
      %1078 = vperm.xlu0 %1077, %v1021
      %v1079 = vpop.permute.xlu0 %1078
      %1080 = vset.pattern.permute.xlu0 0
      %1081 = vperm.xlu0 %1080, %v1022
      %v1082 = vpop.permute.xlu0 %1081
      %1083 = vset.pattern.permute.xlu0 0
      %1084 = vperm.xlu0 %1083, %v1023
      %v1085 = vpop.permute.xlu0 %1084
      %1086 = vset.pattern.permute.xlu0 0
      %1087 = vperm.xlu0 %1086, %v1024
      %v1088 = vpop.permute.xlu0 %1087
      %v1089 = vlaneseq
      %v1090 = vand.u32 %v1089, 127
      %v1091 = vperm.slane %v1043, %v1090
      %v1092 = vadd.s32 %v1090, 4294967288
      %v1093 = vperm.slane %v1046, %v1092
      %vm1094 = vcmask 130112
      %v1095 = vsel %vm1094, %v1093, %v1091
      %v1096 = vperm.slane %v1049, %v1090
      %v1097 = vperm.slane %v1052, %v1092
      %v1098 = vsel %vm1094, %v1097, %v1096
      %v1099 = vperm.slane %v1055, %v1090
      %v1100 = vperm.slane %v1058, %v1092
      %v1101 = vsel %vm1094, %v1100, %v1099
      %v1102 = vperm.slane %v1061, %v1090
      %v1103 = vperm.slane %v1064, %v1092
      %v1104 = vsel %vm1094, %v1103, %v1102
      %v1105 = vperm.slane %v1067, %v1090
      %v1106 = vperm.slane %v1070, %v1092
      %v1107 = vsel %vm1094, %v1106, %v1105
      %v1108 = vperm.slane %v1073, %v1090
      %v1109 = vperm.slane %v1076, %v1092
      %v1110 = vsel %vm1094, %v1109, %v1108
      %v1111 = vperm.slane %v1079, %v1090
      %v1112 = vperm.slane %v1082, %v1092
      %v1113 = vsel %vm1094, %v1112, %v1111
      %v1114 = vperm.slane %v1085, %v1090
      %v1115 = vperm.slane %v1088, %v1092
      %v1116 = vsel %vm1094, %v1115, %v1114
      %vm1117 = vcmask 1041409
      %v1118 = vsel %vm1117, %v1098, %v1095
      %vm1119 = vcmask 1042434
      %v1120 = vsel %vm1119, %v1101, %v1118
      %vm1121 = vcmask 1043459
      %v1122 = vsel %vm1121, %v1104, %v1120
      %vm1123 = vcmask 1044484
      %v1124 = vsel %vm1123, %v1107, %v1122
      %vm1125 = vcmask 1045509
      %v1126 = vsel %vm1125, %v1110, %v1124
      %vm1127 = vcmask 1046534
      %v1128 = vsel %vm1127, %v1113, %v1126
      %vm1129 = vcmask 1047559
      %v1130 = vsel %vm1129, %v1116, %v1128
      %vm1132 = vcmask 130048
      %v1133 = vsel %vm1132, %v1130, -inf
      %1134 = vmax.xlane.f32.xlu0 %v1133
      %v1135 = vpop.xlane.xlu0 %1134
      %v1137 = vperm.slane %v1135, 0
      %v1138 = vperm.slane %v1135, 1
      %v1139 = vperm.slane %v1135, 2
      %v1140 = vperm.slane %v1135, 3
      %v1141 = vperm.slane %v1135, 4
      %v1142 = vperm.slane %v1135, 5
      %v1143 = vperm.slane %v1135, 6
      %v1144 = vperm.slane %v1135, 7
      %v1153 = vsub.f32 %v1009, %v1137
      %v1154 = vsub.f32 %v1010, %v1137
      %v1155 = vsub.f32 %v1011, %v1138
      %v1156 = vsub.f32 %v1012, %v1138
      %v1157 = vsub.f32 %v1013, %v1139
      %v1158 = vsub.f32 %v1014, %v1139
      %v1159 = vsub.f32 %v1015, %v1140
      %v1160 = vsub.f32 %v1016, %v1140
      %v1161 = vsub.f32 %v1017, %v1141
      %v1162 = vsub.f32 %v1018, %v1141
      %v1163 = vsub.f32 %v1019, %v1142
      %v1164 = vsub.f32 %v1020, %v1142
      %v1165 = vsub.f32 %v1021, %v1143
      %v1166 = vsub.f32 %v1022, %v1143
      %v1167 = vsub.f32 %v1023, %v1144
      %v1168 = vsub.f32 %v1024, %v1144
      %v1169 = vmul.f32 %v1153, 1.442695
      %v1170 = vpow.pop %v1169
      %v1171 = vmul.f32 %v1154, 1.442695
      %v1172 = vpow.pop %v1171
      %v1173 = vmul.f32 %v1155, 1.442695
      %v1174 = vpow.pop %v1173
      %v1175 = vmul.f32 %v1156, 1.442695
      %v1176 = vpow.pop %v1175
      %v1177 = vmul.f32 %v1157, 1.442695
      %v1178 = vpow.pop %v1177
      %v1179 = vmul.f32 %v1158, 1.442695
      %v1180 = vpow.pop %v1179
      %v1181 = vmul.f32 %v1159, 1.442695
      %v1182 = vpow.pop %v1181
      %v1183 = vmul.f32 %v1160, 1.442695
      %v1184 = vpow.pop %v1183
      %v1185 = vmul.f32 %v1161, 1.442695
      %v1186 = vpow.pop %v1185
      %v1187 = vmul.f32 %v1162, 1.442695
      %v1188 = vpow.pop %v1187
      %v1189 = vmul.f32 %v1163, 1.442695
      %v1190 = vpow.pop %v1189
      %v1191 = vmul.f32 %v1164, 1.442695
      %v1192 = vpow.pop %v1191
      %v1193 = vmul.f32 %v1165, 1.442695
      %v1194 = vpow.pop %v1193
      %v1195 = vmul.f32 %v1166, 1.442695
      %v1196 = vpow.pop %v1195
      %v1197 = vmul.f32 %v1167, 1.442695
      %v1198 = vpow.pop %v1197
      %v1199 = vmul.f32 %v1168, 1.442695
      %v1200 = vpow.pop %v1199
      %1217 = vset.pattern.permute.xlu0 0
      %1218 = vperm.xlu0 %1217, %v1170
      %v1219 = vpop.permute.xlu0 %1218
      %1220 = vset.pattern.permute.xlu0 0
      %1221 = vperm.xlu0 %1220, %v1172
      %v1222 = vpop.permute.xlu0 %1221
      %1223 = vset.pattern.permute.xlu0 0
      %1224 = vperm.xlu0 %1223, %v1174
      %v1225 = vpop.permute.xlu0 %1224
      %1226 = vset.pattern.permute.xlu0 0
      %1227 = vperm.xlu0 %1226, %v1176
      %v1228 = vpop.permute.xlu0 %1227
      %1229 = vset.pattern.permute.xlu0 0
      %1230 = vperm.xlu0 %1229, %v1178
      %v1231 = vpop.permute.xlu0 %1230
      %1232 = vset.pattern.permute.xlu0 0
      %1233 = vperm.xlu0 %1232, %v1180
      %v1234 = vpop.permute.xlu0 %1233
      %1235 = vset.pattern.permute.xlu0 0
      %1236 = vperm.xlu0 %1235, %v1182
      %v1237 = vpop.permute.xlu0 %1236
      %1238 = vset.pattern.permute.xlu0 0
      %1239 = vperm.xlu0 %1238, %v1184
      %v1240 = vpop.permute.xlu0 %1239
      %1241 = vset.pattern.permute.xlu0 0
      %1242 = vperm.xlu0 %1241, %v1186
      %v1243 = vpop.permute.xlu0 %1242
      %1244 = vset.pattern.permute.xlu0 0
      %1245 = vperm.xlu0 %1244, %v1188
      %v1246 = vpop.permute.xlu0 %1245
      %1247 = vset.pattern.permute.xlu0 0
      %1248 = vperm.xlu0 %1247, %v1190
      %v1249 = vpop.permute.xlu0 %1248
      %1250 = vset.pattern.permute.xlu0 0
      %1251 = vperm.xlu0 %1250, %v1192
      %v1252 = vpop.permute.xlu0 %1251
      %1253 = vset.pattern.permute.xlu0 0
      %1254 = vperm.xlu0 %1253, %v1194
      %v1255 = vpop.permute.xlu0 %1254
      %1256 = vset.pattern.permute.xlu0 0
      %1257 = vperm.xlu0 %1256, %v1196
      %v1258 = vpop.permute.xlu0 %1257
      %1259 = vset.pattern.permute.xlu0 0
      %1260 = vperm.xlu0 %1259, %v1198
      %v1261 = vpop.permute.xlu0 %1260
      %1262 = vset.pattern.permute.xlu0 0
      %1263 = vperm.xlu0 %1262, %v1200
      %v1264 = vpop.permute.xlu0 %1263
      %v1265 = vperm.slane %v1219, %v1090
      %v1266 = vperm.slane %v1222, %v1092
      %v1267 = vsel %vm1094, %v1266, %v1265
      %v1268 = vperm.slane %v1225, %v1090
      %v1269 = vperm.slane %v1228, %v1092
      %v1270 = vsel %vm1094, %v1269, %v1268
      %v1271 = vperm.slane %v1231, %v1090
      %v1272 = vperm.slane %v1234, %v1092
      %v1273 = vsel %vm1094, %v1272, %v1271
      %v1274 = vperm.slane %v1237, %v1090
      %v1275 = vperm.slane %v1240, %v1092
      %v1276 = vsel %vm1094, %v1275, %v1274
      %v1277 = vperm.slane %v1243, %v1090
      %v1278 = vperm.slane %v1246, %v1092
      %v1279 = vsel %vm1094, %v1278, %v1277
      %v1280 = vperm.slane %v1249, %v1090
      %v1281 = vperm.slane %v1252, %v1092
      %v1282 = vsel %vm1094, %v1281, %v1280
      %v1283 = vperm.slane %v1255, %v1090
      %v1284 = vperm.slane %v1258, %v1092
      %v1285 = vsel %vm1094, %v1284, %v1283
      %v1286 = vperm.slane %v1261, %v1090
      %v1287 = vperm.slane %v1264, %v1092
      %v1288 = vsel %vm1094, %v1287, %v1286
      %v1289 = vsel %vm1117, %v1270, %v1267
      %v1290 = vsel %vm1119, %v1273, %v1289
      %v1291 = vsel %vm1121, %v1276, %v1290
      %v1292 = vsel %vm1123, %v1279, %v1291
      %v1293 = vsel %vm1125, %v1282, %v1292
      %v1294 = vsel %vm1127, %v1285, %v1293
      %v1295 = vsel %vm1129, %v1288, %v1294
      %v1297 = vsel %vm1132, %v1295, 0.0
      %1298 = vadd.xlane.f32.xlu0 %v1297
      %v1299 = vpop.xlane.xlu0 %1298
      %v1300 = vrcp.pop %v1299
      %v1302 = vperm.slane %v1300, 0
      %v1303 = vperm.slane %v1300, 1
      %v1304 = vperm.slane %v1300, 2
      %v1305 = vperm.slane %v1300, 3
      %v1306 = vperm.slane %v1300, 4
      %v1307 = vperm.slane %v1300, 5
      %v1308 = vperm.slane %v1300, 6
      %v1309 = vperm.slane %v1300, 7
      %v1318 = vmul.f32 %v1170, %v1302
      %v1319 = vmul.f32 %v1172, %v1302
      %v1320 = vmul.f32 %v1174, %v1303
      %v1321 = vmul.f32 %v1176, %v1303
      %v1322 = vmul.f32 %v1178, %v1304
      %v1323 = vmul.f32 %v1180, %v1304
      %v1324 = vmul.f32 %v1182, %v1305
      %v1325 = vmul.f32 %v1184, %v1305
      %v1326 = vmul.f32 %v1186, %v1306
      %v1327 = vmul.f32 %v1188, %v1306
      %v1328 = vmul.f32 %v1190, %v1307
      %v1329 = vmul.f32 %v1192, %v1307
      %v1330 = vmul.f32 %v1194, %v1308
      %v1331 = vmul.f32 %v1196, %v1308
      %v1332 = vmul.f32 %v1198, %v1309
      %v1333 = vmul.f32 %v1200, %v1309
      %1335 = vset.pattern.permute.xlu0 0
      %1336 = vperm.xlu0 %1335, %v1318
      %v1337 = vpop.permute.xlu0 %1336
      %1340 = vset.pattern.permute.xlu0 0
      %1341 = vperm.xlu0 %1340, %v1319
      %v1342 = vpop.permute.xlu0 %1341
      %1345 = vset.pattern.permute.xlu0 0
      %1346 = vperm.xlu0 %1345, %v1320
      %v1347 = vpop.permute.xlu0 %1346
      %1350 = vset.pattern.permute.xlu0 0
      %1351 = vperm.xlu0 %1350, %v1321
      %v1352 = vpop.permute.xlu0 %1351
      %1355 = vset.pattern.permute.xlu0 0
      %1356 = vperm.xlu0 %1355, %v1322
      %v1357 = vpop.permute.xlu0 %1356
      %1360 = vset.pattern.permute.xlu0 0
      %1361 = vperm.xlu0 %1360, %v1323
      %v1362 = vpop.permute.xlu0 %1361
      %1365 = vset.pattern.permute.xlu0 0
      %1366 = vperm.xlu0 %1365, %v1324
      %v1367 = vpop.permute.xlu0 %1366
      %1370 = vset.pattern.permute.xlu0 0
      %1371 = vperm.xlu0 %1370, %v1325
      %v1372 = vpop.permute.xlu0 %1371
      %1375 = vset.pattern.permute.xlu0 0
      %1376 = vperm.xlu0 %1375, %v1326
      %v1377 = vpop.permute.xlu0 %1376
      %1380 = vset.pattern.permute.xlu0 0
      %1381 = vperm.xlu0 %1380, %v1327
      %v1382 = vpop.permute.xlu0 %1381
      %1385 = vset.pattern.permute.xlu0 0
      %1386 = vperm.xlu0 %1385, %v1328
      %v1387 = vpop.permute.xlu0 %1386
      %1390 = vset.pattern.permute.xlu0 0
      %1391 = vperm.xlu0 %1390, %v1329
      %v1392 = vpop.permute.xlu0 %1391
      %1395 = vset.pattern.permute.xlu0 0
      %1396 = vperm.xlu0 %1395, %v1330
      %v1397 = vpop.permute.xlu0 %1396
      %1400 = vset.pattern.permute.xlu0 0
      %1401 = vperm.xlu0 %1400, %v1331
      %v1402 = vpop.permute.xlu0 %1401
      %1405 = vset.pattern.permute.xlu0 0
      %1406 = vperm.xlu0 %1405, %v1332
      %v1407 = vpop.permute.xlu0 %1406
      %1410 = vset.pattern.permute.xlu0 0
      %1411 = vperm.xlu0 %1410, %v1333
      %v1412 = vpop.permute.xlu0 %1411
      %v1414 = vmul.f32 %v1337, %v819
      %v1415 = vmul.f32 %v1342, %v820
      %v1416 = vmul.f32 %v1347, %v821
      %v1417 = vmul.f32 %v1352, %v822
      %v1418 = vmul.f32 %v1357, %v823
      %v1419 = vmul.f32 %v1362, %v824
      %v1420 = vmul.f32 %v1367, %v825
      %v1421 = vmul.f32 %v1372, %v826
      %v1422 = vmul.f32 %v1377, %v827
      %v1423 = vmul.f32 %v1382, %v828
      %v1424 = vmul.f32 %v1387, %v829
      %v1425 = vmul.f32 %v1392, %v830
      %v1426 = vmul.f32 %v1397, %v831
      %v1427 = vmul.f32 %v1402, %v832
      %v1428 = vmul.f32 %v1407, %v833
      %v1429 = vmul.f32 %v1412, %v834
      %v1430 = vadd.f32 %v1414, %v1415
      %v1431 = vrot.slane %v1430, 4
      %v1432 = vadd.f32 %v1430, %v1431
      %v1433 = vrot.slane %v1432, 2
      %v1434 = vadd.f32 %v1432, %v1433
      %v1435 = vrot.slane %v1434, 1
      %v1436 = vadd.f32 %v1434, %v1435
      %v1437 = vadd.f32 %v1416, %v1417
      %v1438 = vrot.slane %v1437, 4
      %v1439 = vadd.f32 %v1437, %v1438
      %v1440 = vrot.slane %v1439, 2
      %v1441 = vadd.f32 %v1439, %v1440
      %v1442 = vrot.slane %v1441, 1
      %v1443 = vadd.f32 %v1441, %v1442
      %v1444 = vadd.f32 %v1418, %v1419
      %v1445 = vrot.slane %v1444, 4
      %v1446 = vadd.f32 %v1444, %v1445
      %v1447 = vrot.slane %v1446, 2
      %v1448 = vadd.f32 %v1446, %v1447
      %v1449 = vrot.slane %v1448, 1
      %v1450 = vadd.f32 %v1448, %v1449
      %v1451 = vadd.f32 %v1420, %v1421
      %v1452 = vrot.slane %v1451, 4
      %v1453 = vadd.f32 %v1451, %v1452
      %v1454 = vrot.slane %v1453, 2
      %v1455 = vadd.f32 %v1453, %v1454
      %v1456 = vrot.slane %v1455, 1
      %v1457 = vadd.f32 %v1455, %v1456
      %v1458 = vadd.f32 %v1422, %v1423
      %v1459 = vrot.slane %v1458, 4
      %v1460 = vadd.f32 %v1458, %v1459
      %v1461 = vrot.slane %v1460, 2
      %v1462 = vadd.f32 %v1460, %v1461
      %v1463 = vrot.slane %v1462, 1
      %v1464 = vadd.f32 %v1462, %v1463
      %v1465 = vadd.f32 %v1424, %v1425
      %v1466 = vrot.slane %v1465, 4
      %v1467 = vadd.f32 %v1465, %v1466
      %v1468 = vrot.slane %v1467, 2
      %v1469 = vadd.f32 %v1467, %v1468
      %v1470 = vrot.slane %v1469, 1
      %v1471 = vadd.f32 %v1469, %v1470
      %v1472 = vadd.f32 %v1426, %v1427
      %v1473 = vrot.slane %v1472, 4
      %v1474 = vadd.f32 %v1472, %v1473
      %v1475 = vrot.slane %v1474, 2
      %v1476 = vadd.f32 %v1474, %v1475
      %v1477 = vrot.slane %v1476, 1
      %v1478 = vadd.f32 %v1476, %v1477
      %v1479 = vadd.f32 %v1428, %v1429
      %v1480 = vrot.slane %v1479, 4
      %v1481 = vadd.f32 %v1479, %v1480
      %v1482 = vrot.slane %v1481, 2
      %v1483 = vadd.f32 %v1481, %v1482
      %v1484 = vrot.slane %v1483, 1
      %v1485 = vadd.f32 %v1483, %v1484
      %1486 = vst [vmem:[#allocation2] sm:$0xf] %v835
      %v1487 = vpack.c.bf16 %v1436, %v1436
      %v1488 = vpack.c.bf16 %v1443, %v1443
      %v1489 = vpack.c.bf16 %v1450, %v1450
      %v1490 = vpack.c.bf16 %v1457, %v1457
      %v1491 = vpack.c.bf16 %v1464, %v1464
      %v1492 = vpack.c.bf16 %v1471, %v1471
      %v1493 = vpack.c.bf16 %v1478, %v1478
      %v1494 = vpack.c.bf16 %v1485, %v1485
      %v1503 = vunpack.c.l.b16 %v1487
      %v1504 = vunpack.c.l.b16 %v1488
      %v1505 = vunpack.c.l.b16 %v1489
      %v1506 = vunpack.c.l.b16 %v1490
      %v1507 = vunpack.c.l.b16 %v1491
      %v1508 = vunpack.c.l.b16 %v1492
      %v1509 = vunpack.c.l.b16 %v1493
      %v1510 = vunpack.c.l.b16 %v1494
      %v1511 = vsel %vm1117, %v1504, %v1503
      %v1512 = vsel %vm1119, %v1505, %v1511
      %v1513 = vsel %vm1121, %v1506, %v1512
      %v1514 = vsel %vm1123, %v1507, %v1513
      %v1515 = vsel %vm1125, %v1508, %v1514
      %v1516 = vsel %vm1127, %v1509, %v1515
      %v1517 = vsel %vm1129, %v1510, %v1516
      %v1518 = vpack.c.b16 %v1517, %v1517
      %1520 = vst [vmem:[#allocation3] sm:$0xf] %v1518
      %vm1521 = vcmask 7168
      %1522 = vst.msk [vmem:[#allocation4] sm:$0xff] %vm1521, -1e+30
      %1523 = vst.msk [vmem:[#allocation5] sm:$0xff] %vm1521, 0.0
      %1524 = vst [vmem:[%s16] sm:$0xff] %v818
      %v1533 = vsel %vm1117, %v1443, %v1436
      %v1534 = vsel %vm1119, %v1450, %v1533
      %v1535 = vsel %vm1121, %v1457, %v1534
      %v1536 = vsel %vm1123, %v1464, %v1535
      %v1537 = vsel %vm1125, %v1471, %v1536
      %v1538 = vsel %vm1127, %v1478, %v1537
      %v1539 = vsel %vm1129, %v1485, %v1538
      %1541 = vst [vmem:[%s15] sm:$0xff] %v1539
      %v1542 = vperm.slane %v1337, %v1090
      %v1543 = vperm.slane %v1342, %v1092
      %v1544 = vsel %vm1094, %v1543, %v1542
      %v1545 = vperm.slane %v1347, %v1090
      %v1546 = vperm.slane %v1352, %v1092
      %v1547 = vsel %vm1094, %v1546, %v1545
      %v1548 = vperm.slane %v1357, %v1090
      %v1549 = vperm.slane %v1362, %v1092
      %v1550 = vsel %vm1094, %v1549, %v1548
      %v1551 = vperm.slane %v1367, %v1090
      %v1552 = vperm.slane %v1372, %v1092
      %v1553 = vsel %vm1094, %v1552, %v1551
      %v1554 = vperm.slane %v1377, %v1090
      %v1555 = vperm.slane %v1382, %v1092
      %v1556 = vsel %vm1094, %v1555, %v1554
      %v1557 = vperm.slane %v1387, %v1090
      %v1558 = vperm.slane %v1392, %v1092
      %v1559 = vsel %vm1094, %v1558, %v1557
      %v1560 = vperm.slane %v1397, %v1090
      %v1561 = vperm.slane %v1402, %v1092
      %v1562 = vsel %vm1094, %v1561, %v1560
      %v1563 = vperm.slane %v1407, %v1090
      %v1564 = vperm.slane %v1412, %v1092
      %v1565 = vsel %vm1094, %v1564, %v1563
      %v1566 = vsel %vm1117, %v1547, %v1544
      %v1567 = vsel %vm1119, %v1550, %v1566
      %v1568 = vsel %vm1121, %v1553, %v1567
      %v1569 = vsel %vm1123, %v1556, %v1568
      %v1570 = vsel %vm1125, %v1559, %v1569
      %v1571 = vsel %vm1127, %v1562, %v1570
      %v1572 = vsel %vm1129, %v1565, %v1571
      %1574 = vst.msk [vmem:[#allocation18] sm:$0xff] %vm1132, %v1572
    $region85: #{attention_decoder_forward.1} parent=1 // pred_fallthru
      _
    %v1575 = vld [vmem:[#allocation2] sm:$0xf]
    %v1576 = vld [vmem:[#allocation14] sm:$0xff]
    %v1577 = vld [vmem:[#allocation14 + $0x8] sm:$0xff]
    %v1578 = vld [vmem:[#allocation14 + $0x10] sm:$0xff]
    %v1579 = vld [vmem:[#allocation14 + $0x18] sm:$0xff]
    %v1580 = vld [vmem:[#allocation14 + $0x20] sm:$0xff]
    %v1581 = vld [vmem:[#allocation14 + $0x28] sm:$0xff]
    %v1582 = vld [vmem:[#allocation14 + $0x30] sm:$0xff]
    %v1583 = vld [vmem:[#allocation14 + $0x38] sm:$0xff]
    %v1584 = vld [vmem:[#allocation14 + $0x40] sm:$0xff]
    %v1585 = vld [vmem:[#allocation14 + $0x48] sm:$0xff]
    %v1586 = vld [vmem:[#allocation14 + $0x50] sm:$0xff]
    %v1587 = vld [vmem:[#allocation14 + $0x58] sm:$0xff]
    %v1588 = vld [vmem:[#allocation14 + $0x60] sm:$0xff]
    %v1589 = vld [vmem:[#allocation14 + $0x68] sm:$0xff]
    %v1590 = vld [vmem:[#allocation14 + $0x70] sm:$0xff]
    %v1591 = vld [vmem:[#allocation14 + $0x78] sm:$0xff]
    %v1592 = vld [vmem:[#allocation14 + $0x80] sm:$0xff]
    %v1593 = vld [vmem:[#allocation14 + $0x88] sm:$0xff]
    %v1594 = vld [vmem:[#allocation14 + $0x90] sm:$0xff]
    %v1595 = vld [vmem:[#allocation14 + $0x98] sm:$0xff]
    %v1596 = vld [vmem:[#allocation14 + $0xa0] sm:$0xff]
    %v1597 = vld [vmem:[#allocation14 + $0xa8] sm:$0xff]
    %v1598 = vld [vmem:[#allocation14 + $0xb0] sm:$0xff]
    %v1599 = vld [vmem:[#allocation14 + $0xb8] sm:$0xff]
    %v1600 = vld [vmem:[#allocation14 + $0xc0] sm:$0xff]
    %v1601 = vld [vmem:[#allocation14 + $0xc8] sm:$0xff]
    %v1602 = vld [vmem:[#allocation14 + $0xd0] sm:$0xff]
    %v1603 = vld [vmem:[#allocation14 + $0xd8] sm:$0xff]
    %v1604 = vld [vmem:[#allocation14 + $0xe0] sm:$0xff]
    %v1605 = vld [vmem:[#allocation14 + $0xe8] sm:$0xff]
    %v1606 = vld [vmem:[#allocation14 + $0xf0] sm:$0xff]
    %v1607 = vld [vmem:[#allocation14 + $0xf8] sm:$0xff]
    %v1608 = vld [vmem:[#allocation3] sm:$0xf]
    %v1609 = vld [vmem:[#allocation15] sm:$0xff]
    %v1610 = vld [vmem:[#allocation15 + $0x8] sm:$0xff]
    %v1611 = vld [vmem:[#allocation15 + $0x10] sm:$0xff]
    %v1612 = vld [vmem:[#allocation15 + $0x18] sm:$0xff]
    %v1613 = vld [vmem:[#allocation15 + $0x20] sm:$0xff]
    %v1614 = vld [vmem:[#allocation15 + $0x28] sm:$0xff]
    %v1615 = vld [vmem:[#allocation15 + $0x30] sm:$0xff]
    %v1616 = vld [vmem:[#allocation15 + $0x38] sm:$0xff]
    %v1617 = vld [vmem:[#allocation15 + $0x40] sm:$0xff]
    %v1618 = vld [vmem:[#allocation15 + $0x48] sm:$0xff]
    %v1619 = vld [vmem:[#allocation15 + $0x50] sm:$0xff]
    %v1620 = vld [vmem:[#allocation15 + $0x58] sm:$0xff]
    %v1621 = vld [vmem:[#allocation15 + $0x60] sm:$0xff]
    %v1622 = vld [vmem:[#allocation15 + $0x68] sm:$0xff]
    %v1623 = vld [vmem:[#allocation15 + $0x70] sm:$0xff]
    %v1624 = vld [vmem:[#allocation15 + $0x78] sm:$0xff]
    %v1625 = vld [vmem:[#allocation15 + $0x80] sm:$0xff]
    %v1626 = vld [vmem:[#allocation15 + $0x88] sm:$0xff]
    %v1627 = vld [vmem:[#allocation15 + $0x90] sm:$0xff]
    %v1628 = vld [vmem:[#allocation15 + $0x98] sm:$0xff]
    %v1629 = vld [vmem:[#allocation15 + $0xa0] sm:$0xff]
    %v1630 = vld [vmem:[#allocation15 + $0xa8] sm:$0xff]
    %v1631 = vld [vmem:[#allocation15 + $0xb0] sm:$0xff]
    %v1632 = vld [vmem:[#allocation15 + $0xb8] sm:$0xff]
    %v1633 = vld [vmem:[#allocation15 + $0xc0] sm:$0xff]
    %v1634 = vld [vmem:[#allocation15 + $0xc8] sm:$0xff]
    %v1635 = vld [vmem:[#allocation15 + $0xd0] sm:$0xff]
    %v1636 = vld [vmem:[#allocation15 + $0xd8] sm:$0xff]
    %v1637 = vld [vmem:[#allocation15 + $0xe0] sm:$0xff]
    %v1638 = vld [vmem:[#allocation15 + $0xe8] sm:$0xff]
    %v1639 = vld [vmem:[#allocation15 + $0xf0] sm:$0xff]
    %v1640 = vld [vmem:[#allocation15 + $0xf8] sm:$0xff]
    %v1673 = vunpack.c.l.b16 %v1609
    %v1674 = vunpack.c.h.b16 %v1609
    %v1675 = vunpack.c.l.b16 %v1610
    %v1676 = vunpack.c.h.b16 %v1610
    %v1677 = vunpack.c.l.b16 %v1611
    %v1678 = vunpack.c.h.b16 %v1611
    %v1679 = vunpack.c.l.b16 %v1612
    %v1680 = vunpack.c.h.b16 %v1612
    %v1681 = vunpack.c.l.b16 %v1613
    %v1682 = vunpack.c.h.b16 %v1613
    %v1683 = vunpack.c.l.b16 %v1614
    %v1684 = vunpack.c.h.b16 %v1614
    %v1685 = vunpack.c.l.b16 %v1615
    %v1686 = vunpack.c.h.b16 %v1615
    %v1687 = vunpack.c.l.b16 %v1616
    %v1688 = vunpack.c.h.b16 %v1616
    %v1689 = vunpack.c.l.b16 %v1617
    %v1690 = vunpack.c.h.b16 %v1617
    %v1691 = vunpack.c.l.b16 %v1618
    %v1692 = vunpack.c.h.b16 %v1618
    %v1693 = vunpack.c.l.b16 %v1619
    %v1694 = vunpack.c.h.b16 %v1619
    %v1695 = vunpack.c.l.b16 %v1620
    %v1696 = vunpack.c.h.b16 %v1620
    %v1697 = vunpack.c.l.b16 %v1621
    %v1698 = vunpack.c.h.b16 %v1621
    %v1699 = vunpack.c.l.b16 %v1622
    %v1700 = vunpack.c.h.b16 %v1622
    %v1701 = vunpack.c.l.b16 %v1623
    %v1702 = vunpack.c.h.b16 %v1623
    %v1703 = vunpack.c.l.b16 %v1624
    %v1704 = vunpack.c.h.b16 %v1624
    %v1705 = vunpack.c.l.b16 %v1625
    %v1706 = vunpack.c.h.b16 %v1625
    %v1707 = vunpack.c.l.b16 %v1626
    %v1708 = vunpack.c.h.b16 %v1626
    %v1709 = vunpack.c.l.b16 %v1627
    %v1710 = vunpack.c.h.b16 %v1627
    %v1711 = vunpack.c.l.b16 %v1628
    %v1712 = vunpack.c.h.b16 %v1628
    %v1713 = vunpack.c.l.b16 %v1629
    %v1714 = vunpack.c.h.b16 %v1629
    %v1715 = vunpack.c.l.b16 %v1630
    %v1716 = vunpack.c.h.b16 %v1630
    %v1717 = vunpack.c.l.b16 %v1631
    %v1718 = vunpack.c.h.b16 %v1631
    %v1719 = vunpack.c.l.b16 %v1632
    %v1720 = vunpack.c.h.b16 %v1632
    %v1721 = vunpack.c.l.b16 %v1633
    %v1722 = vunpack.c.h.b16 %v1633
    %v1723 = vunpack.c.l.b16 %v1634
    %v1724 = vunpack.c.h.b16 %v1634
    %v1725 = vunpack.c.l.b16 %v1635
    %v1726 = vunpack.c.h.b16 %v1635
    %v1727 = vunpack.c.l.b16 %v1636
    %v1728 = vunpack.c.h.b16 %v1636
    %v1729 = vunpack.c.l.b16 %v1637
    %v1730 = vunpack.c.h.b16 %v1637
    %v1731 = vunpack.c.l.b16 %v1638
    %v1732 = vunpack.c.h.b16 %v1638
    %v1733 = vunpack.c.l.b16 %v1639
    %v1734 = vunpack.c.h.b16 %v1639
    %v1735 = vunpack.c.l.b16 %v1640
    %v1736 = vunpack.c.h.b16 %v1640
    %v1737 = vpack.c.b16 %v1677, %v1673
    %v1738 = vpack.c.b16 %v1678, %v1674
    %v1739 = vpack.c.b16 %v1679, %v1675
    %v1740 = vpack.c.b16 %v1680, %v1676
    %v1741 = vpack.c.b16 %v1685, %v1681
    %v1742 = vpack.c.b16 %v1686, %v1682
    %v1743 = vpack.c.b16 %v1687, %v1683
    %v1744 = vpack.c.b16 %v1688, %v1684
    %v1745 = vpack.c.b16 %v1693, %v1689
    %v1746 = vpack.c.b16 %v1694, %v1690
    %v1747 = vpack.c.b16 %v1695, %v1691
    %v1748 = vpack.c.b16 %v1696, %v1692
    %v1749 = vpack.c.b16 %v1701, %v1697
    %v1750 = vpack.c.b16 %v1702, %v1698
    %v1751 = vpack.c.b16 %v1703, %v1699
    %v1752 = vpack.c.b16 %v1704, %v1700
    %v1753 = vpack.c.b16 %v1709, %v1705
    %v1754 = vpack.c.b16 %v1710, %v1706
    %v1755 = vpack.c.b16 %v1711, %v1707
    %v1756 = vpack.c.b16 %v1712, %v1708
    %v1757 = vpack.c.b16 %v1717, %v1713
    %v1758 = vpack.c.b16 %v1718, %v1714
    %v1759 = vpack.c.b16 %v1719, %v1715
    %v1760 = vpack.c.b16 %v1720, %v1716
    %v1761 = vpack.c.b16 %v1725, %v1721
    %v1762 = vpack.c.b16 %v1726, %v1722
    %v1763 = vpack.c.b16 %v1727, %v1723
    %v1764 = vpack.c.b16 %v1728, %v1724
    %v1765 = vpack.c.b16 %v1733, %v1729
    %v1766 = vpack.c.b16 %v1734, %v1730
    %v1767 = vpack.c.b16 %v1735, %v1731
    %v1768 = vpack.c.b16 %v1736, %v1732
    %1801 = vmatpush.bf16.msra.mxu0 %v1765
    %1802 = vmatpush.bf16.msra.mxu0 %v1761
    %1803 = vmatpush.bf16.msra.mxu0 %v1757
    %1804 = vmatpush.bf16.msra.mxu0 %v1753
    %1805 = vmatpush.bf16.msra.mxu0 %v1749
    %1806 = vmatpush.bf16.msra.mxu0 %v1745
    %1807 = vmatpush.bf16.msra.mxu0 %v1741
    %1808 = vmatpush.bf16.msra.mxu0 %v1737
    %1809 = vmatmul.bf16.gmra.mxu0 %v1608
    %v1810 = vpop.f32.mrf.mxu0
    %v1811 = vadd.f32 0.0, %v1810
    %v1812 = vpop.f32.mrf.mxu0
    %1813 = vdwg.mxu0
    %1814 = vmatpush.bf16.msra.mxu0 %v1766
    %1815 = vmatpush.bf16.msra.mxu0 %v1762
    %1816 = vmatpush.bf16.msra.mxu0 %v1758
    %1817 = vmatpush.bf16.msra.mxu0 %v1754
    %1818 = vmatpush.bf16.msra.mxu0 %v1750
    %1819 = vmatpush.bf16.msra.mxu0 %v1746
    %1820 = vmatpush.bf16.msra.mxu0 %v1742
    %1821 = vmatpush.bf16.msra.mxu0 %v1738
    %1822 = vmatmul.bf16.gmra.mxu0 %v1608
    %v1823 = vpop.f32.mrf.mxu0
    %v1824 = vadd.f32 0.0, %v1823
    %v1825 = vpop.f32.mrf.mxu0
    %1826 = vdwg.mxu0
    %1827 = vmatpush.bf16.msra.mxu0 %v1767
    %1828 = vmatpush.bf16.msra.mxu0 %v1763
    %1829 = vmatpush.bf16.msra.mxu0 %v1759
    %1830 = vmatpush.bf16.msra.mxu0 %v1755
    %1831 = vmatpush.bf16.msra.mxu0 %v1751
    %1832 = vmatpush.bf16.msra.mxu0 %v1747
    %1833 = vmatpush.bf16.msra.mxu0 %v1743
    %1834 = vmatpush.bf16.msra.mxu0 %v1739
    %1835 = vmatmul.bf16.gmra.mxu0 %v1608
    %v1836 = vpop.f32.mrf.mxu0
    %v1837 = vadd.f32 0.0, %v1836
    %v1838 = vpop.f32.mrf.mxu0
    %1839 = vdwg.mxu0
    %1840 = vmatpush.bf16.msra.mxu0 %v1768
    %1841 = vmatpush.bf16.msra.mxu0 %v1764
    %1842 = vmatpush.bf16.msra.mxu0 %v1760
    %1843 = vmatpush.bf16.msra.mxu0 %v1756
    %1844 = vmatpush.bf16.msra.mxu0 %v1752
    %1845 = vmatpush.bf16.msra.mxu0 %v1748
    %1846 = vmatpush.bf16.msra.mxu0 %v1744
    %1847 = vmatpush.bf16.msra.mxu0 %v1740
    %1848 = vmatmul.bf16.gmra.mxu0 %v1608
    %v1849 = vpop.f32.mrf.mxu0
    %v1850 = vadd.f32 0.0, %v1849
    %v1851 = vpop.f32.mrf.mxu0
    %1852 = vdwg.mxu0
    %v1885 = vunpack.c.l.b16 %v1576
    %v1886 = vunpack.c.h.b16 %v1576
    %v1887 = vunpack.c.l.b16 %v1577
    %v1888 = vunpack.c.h.b16 %v1577
    %v1889 = vunpack.c.l.b16 %v1578
    %v1890 = vunpack.c.h.b16 %v1578
    %v1891 = vunpack.c.l.b16 %v1579
    %v1892 = vunpack.c.h.b16 %v1579
    %v1893 = vunpack.c.l.b16 %v1580
    %v1894 = vunpack.c.h.b16 %v1580
    %v1895 = vunpack.c.l.b16 %v1581
    %v1896 = vunpack.c.h.b16 %v1581
    %v1897 = vunpack.c.l.b16 %v1582
    %v1898 = vunpack.c.h.b16 %v1582
    %v1899 = vunpack.c.l.b16 %v1583
    %v1900 = vunpack.c.h.b16 %v1583
    %v1901 = vunpack.c.l.b16 %v1584
    %v1902 = vunpack.c.h.b16 %v1584
    %v1903 = vunpack.c.l.b16 %v1585
    %v1904 = vunpack.c.h.b16 %v1585
    %v1905 = vunpack.c.l.b16 %v1586
    %v1906 = vunpack.c.h.b16 %v1586
    %v1907 = vunpack.c.l.b16 %v1587
    %v1908 = vunpack.c.h.b16 %v1587
    %v1909 = vunpack.c.l.b16 %v1588
    %v1910 = vunpack.c.h.b16 %v1588
    %v1911 = vunpack.c.l.b16 %v1589
    %v1912 = vunpack.c.h.b16 %v1589
    %v1913 = vunpack.c.l.b16 %v1590
    %v1914 = vunpack.c.h.b16 %v1590
    %v1915 = vunpack.c.l.b16 %v1591
    %v1916 = vunpack.c.h.b16 %v1591
    %v1917 = vunpack.c.l.b16 %v1592
    %v1918 = vunpack.c.h.b16 %v1592
    %v1919 = vunpack.c.l.b16 %v1593
    %v1920 = vunpack.c.h.b16 %v1593
    %v1921 = vunpack.c.l.b16 %v1594
    %v1922 = vunpack.c.h.b16 %v1594
    %v1923 = vunpack.c.l.b16 %v1595
    %v1924 = vunpack.c.h.b16 %v1595
    %v1925 = vunpack.c.l.b16 %v1596
    %v1926 = vunpack.c.h.b16 %v1596
    %v1927 = vunpack.c.l.b16 %v1597
    %v1928 = vunpack.c.h.b16 %v1597
    %v1929 = vunpack.c.l.b16 %v1598
    %v1930 = vunpack.c.h.b16 %v1598
    %v1931 = vunpack.c.l.b16 %v1599
    %v1932 = vunpack.c.h.b16 %v1599
    %v1933 = vunpack.c.l.b16 %v1600
    %v1934 = vunpack.c.h.b16 %v1600
    %v1935 = vunpack.c.l.b16 %v1601
    %v1936 = vunpack.c.h.b16 %v1601
    %v1937 = vunpack.c.l.b16 %v1602
    %v1938 = vunpack.c.h.b16 %v1602
    %v1939 = vunpack.c.l.b16 %v1603
    %v1940 = vunpack.c.h.b16 %v1603
    %v1941 = vunpack.c.l.b16 %v1604
    %v1942 = vunpack.c.h.b16 %v1604
    %v1943 = vunpack.c.l.b16 %v1605
    %v1944 = vunpack.c.h.b16 %v1605
    %v1945 = vunpack.c.l.b16 %v1606
    %v1946 = vunpack.c.h.b16 %v1606
    %v1947 = vunpack.c.l.b16 %v1607
    %v1948 = vunpack.c.h.b16 %v1607
    %v1949 = vpack.c.b16 %v1889, %v1885
    %v1950 = vpack.c.b16 %v1890, %v1886
    %v1951 = vpack.c.b16 %v1891, %v1887
    %v1952 = vpack.c.b16 %v1892, %v1888
    %v1953 = vpack.c.b16 %v1897, %v1893
    %v1954 = vpack.c.b16 %v1898, %v1894
    %v1955 = vpack.c.b16 %v1899, %v1895
    %v1956 = vpack.c.b16 %v1900, %v1896
    %v1957 = vpack.c.b16 %v1905, %v1901
    %v1958 = vpack.c.b16 %v1906, %v1902
    %v1959 = vpack.c.b16 %v1907, %v1903
    %v1960 = vpack.c.b16 %v1908, %v1904
    %v1961 = vpack.c.b16 %v1913, %v1909
    %v1962 = vpack.c.b16 %v1914, %v1910
    %v1963 = vpack.c.b16 %v1915, %v1911
    %v1964 = vpack.c.b16 %v1916, %v1912
    %v1965 = vpack.c.b16 %v1921, %v1917
    %v1966 = vpack.c.b16 %v1922, %v1918
    %v1967 = vpack.c.b16 %v1923, %v1919
    %v1968 = vpack.c.b16 %v1924, %v1920
    %v1969 = vpack.c.b16 %v1929, %v1925
    %v1970 = vpack.c.b16 %v1930, %v1926
    %v1971 = vpack.c.b16 %v1931, %v1927
    %v1972 = vpack.c.b16 %v1932, %v1928
    %v1973 = vpack.c.b16 %v1937, %v1933
    %v1974 = vpack.c.b16 %v1938, %v1934
    %v1975 = vpack.c.b16 %v1939, %v1935
    %v1976 = vpack.c.b16 %v1940, %v1936
    %v1977 = vpack.c.b16 %v1945, %v1941
    %v1978 = vpack.c.b16 %v1946, %v1942
    %v1979 = vpack.c.b16 %v1947, %v1943
    %v1980 = vpack.c.b16 %v1948, %v1944
    %2013 = vmatpush.bf16.msra.mxu0 %v1977
    %2014 = vmatpush.bf16.msra.mxu0 %v1973
    %2015 = vmatpush.bf16.msra.mxu0 %v1969
    %2016 = vmatpush.bf16.msra.mxu0 %v1965
    %2017 = vmatpush.bf16.msra.mxu0 %v1961
    %2018 = vmatpush.bf16.msra.mxu0 %v1957
    %2019 = vmatpush.bf16.msra.mxu0 %v1953
    %2020 = vmatpush.bf16.msra.mxu0 %v1949
    %2021 = vmatmul.bf16.gmra.mxu0 %v1575
    %v2022 = vpop.f32.mrf.mxu0
    %v2023 = vadd.f32 %v1811, %v2022
    %v2024 = vpop.f32.mrf.mxu0
    %2025 = vdwg.mxu0
    %2026 = vmatpush.bf16.msra.mxu0 %v1978
    %2027 = vmatpush.bf16.msra.mxu0 %v1974
    %2028 = vmatpush.bf16.msra.mxu0 %v1970
    %2029 = vmatpush.bf16.msra.mxu0 %v1966
    %2030 = vmatpush.bf16.msra.mxu0 %v1962
    %2031 = vmatpush.bf16.msra.mxu0 %v1958
    %2032 = vmatpush.bf16.msra.mxu0 %v1954
    %2033 = vmatpush.bf16.msra.mxu0 %v1950
    %2034 = vmatmul.bf16.gmra.mxu0 %v1575
    %v2035 = vpop.f32.mrf.mxu0
    %v2036 = vadd.f32 %v1824, %v2035
    %v2037 = vpop.f32.mrf.mxu0
    %2038 = vdwg.mxu0
    %2039 = vmatpush.bf16.msra.mxu0 %v1979
    %2040 = vmatpush.bf16.msra.mxu0 %v1975
    %2041 = vmatpush.bf16.msra.mxu0 %v1971
    %2042 = vmatpush.bf16.msra.mxu0 %v1967
    %2043 = vmatpush.bf16.msra.mxu0 %v1963
    %2044 = vmatpush.bf16.msra.mxu0 %v1959
    %2045 = vmatpush.bf16.msra.mxu0 %v1955
    %2046 = vmatpush.bf16.msra.mxu0 %v1951
    %2047 = vmatmul.bf16.gmra.mxu0 %v1575
    %v2048 = vpop.f32.mrf.mxu0
    %v2049 = vadd.f32 %v1837, %v2048
    %v2050 = vpop.f32.mrf.mxu0
    %2051 = vdwg.mxu0
    %2052 = vmatpush.bf16.msra.mxu0 %v1980
    %2053 = vmatpush.bf16.msra.mxu0 %v1976
    %2054 = vmatpush.bf16.msra.mxu0 %v1972
    %2055 = vmatpush.bf16.msra.mxu0 %v1968
    %2056 = vmatpush.bf16.msra.mxu0 %v1964
    %2057 = vmatpush.bf16.msra.mxu0 %v1960
    %2058 = vmatpush.bf16.msra.mxu0 %v1956
    %2059 = vmatpush.bf16.msra.mxu0 %v1952
    %2060 = vmatmul.bf16.gmra.mxu0 %v1575
    %v2061 = vpop.f32.mrf.mxu0
    %v2062 = vadd.f32 %v1850, %v2061
    %v2063 = vpop.f32.mrf.mxu0
    %2064 = vdwg.mxu0
    %v2065 = vld [vmem:[%s13] sm:$0xf]
    %v2067 = vperm.slane %v2065, 0
    %v2068 = vperm.slane %v2065, 1
    %v2069 = vperm.slane %v2065, 2
    %v2070 = vperm.slane %v2065, 3
    %v2075 = vadd.f32 %v2023, %v2067
    %v2076 = vadd.f32 %v2036, %v2068
    %v2077 = vadd.f32 %v2049, %v2069
    %v2078 = vadd.f32 %v2062, %v2070
    %s2079 = smul.u32 0, 512
    %s2080 = sshra.s32 %s2079, 7
    %s2081 = sand.u32 %s2079, 127
    %s2082 = smul.addr %s2080, 8
    %s2083 = scalar_lea.vmem [#allocation17], %s2082
    %2084 = vst [vmem:[%s2083] sm:$0xff] %v2075
    %2085 = vst [vmem:[%s2083 + $0x8] sm:$0xff] %v2076
    %2086 = vst [vmem:[%s2083 + $0x10] sm:$0xff] %v2077
    %2087 = vst [vmem:[%s2083 + $0x18] sm:$0xff] %v2078
    %v2088 = vld [vmem:[#allocation4] sm:$0xff]
    %v2089 = vmax.f32 %v2075, %v2076
    %v2090 = vmax.f32 %v2077, %v2078
    %v2091 = vmax.f32 %v2089, %v2090
    %2092 = vmax.xlane.f32.xlu0 %v2091
    %v2093 = vpop.xlane.xlu0 %2092
    %v2094 = vmax.f32 %v2088, %v2093
    %v2095 = vld [vmem:[#allocation5] sm:$0xff]
    %v2096 = vsub.f32 %v2088, %v2094
    %v2097 = vmul.f32 %v2096, 1.442695
    %v2098 = vpow.pop %v2097
    %v2099 = vmul.f32 %v2095, %v2098
    %2101 = vset.pattern.permute.xlu0 0
    %2102 = vperm.xlu0 %2101, %v2094
    %v2103 = vpop.permute.xlu0 %2102
    %v2105 = vsub.f32 %v2075, %v2103
    %v2106 = vsub.f32 %v2076, %v2103
    %v2107 = vsub.f32 %v2077, %v2103
    %v2108 = vsub.f32 %v2078, %v2103
    %v2109 = vmul.f32 %v2105, 1.442695
    %v2110 = vpow.pop %v2109
    %v2111 = vmul.f32 %v2106, 1.442695
    %v2112 = vpow.pop %v2111
    %v2113 = vmul.f32 %v2107, 1.442695
    %v2114 = vpow.pop %v2113
    %v2115 = vmul.f32 %v2108, 1.442695
    %v2116 = vpow.pop %v2115
    %v2117 = vadd.f32 %v2110, %v2112
    %v2118 = vadd.f32 %v2117, %v2114
    %v2119 = vadd.f32 %v2118, %v2116
    %2120 = vadd.xlane.f32.xlu0 %v2119
    %v2121 = vpop.xlane.xlu0 %2120
    %v2122 = vadd.f32 %v2099, %v2121
    %vm2123 = vcmask 7168
    %2124 = vst.msk [vmem:[#allocation5] sm:$0xff] %vm2123, %v2122
    %2125 = vst.msk [vmem:[#allocation4] sm:$0xff] %vm2123, %v2094
    // Predicated region
    $region86: #{attention_decoder_forward.1} parent=1 // pred_check
      %p2126 = pneg %p147
    $region87: #{attention_decoder_forward.1} parent=1 // pred_check_branch
      %2128 = sbr.rel (%p2126) target = $region89
    $region88: #{attention_decoder_forward.1} parent=1 // pred_region
      %v2129 = vld [vmem:[#allocation4] sm:$0xff]
      %v2130 = vld [vmem:[#allocation5] sm:$0xff]
      %v2131 = vlog2.pop %v2130
      %v2132 = vmul.f32 %v2131, 0.6931472
      %v2133 = vadd.f32 %v2129, %v2132
      %v2134 = vld [vmem:[#allocation17] sm:$0xff]
      %v2135 = vld [vmem:[#allocation17 + $0x8] sm:$0xff]
      %v2136 = vld [vmem:[#allocation17 + $0x10] sm:$0xff]
      %v2137 = vld [vmem:[#allocation17 + $0x18] sm:$0xff]
      %2139 = vset.pattern.permute.xlu0 0
      %2140 = vperm.xlu0 %2139, %v2133
      %v2141 = vpop.permute.xlu0 %2140
      %v2143 = vsub.f32 %v2134, %v2141
      %v2144 = vsub.f32 %v2135, %v2141
      %v2145 = vsub.f32 %v2136, %v2141
      %v2146 = vsub.f32 %v2137, %v2141
      %2147 = vst [vmem:[#allocation17] sm:$0xff] %v2143
      %2148 = vst [vmem:[#allocation17 + $0x8] sm:$0xff] %v2144
      %2149 = vst [vmem:[#allocation17 + $0x10] sm:$0xff] %v2145
      %2150 = vst [vmem:[#allocation17 + $0x18] sm:$0xff] %v2146
    $region89: #{attention_decoder_forward.1} parent=1 // pred_fallthru
      _
    // Predicated region
    $region90: #{attention_decoder_forward.1} parent=1 // pred_check
      _
    $region91: #{attention_decoder_forward.1} parent=1 // pred_check_branch
      %2152 = sbr.rel (0) target = $region93
    $region92: #{attention_decoder_forward.1} parent=1 // pred_region
      %2154 = vsyncadd [#allocation8], 0
      %s2156 = sshll.u32 [#allocation17], 4
      %s2157 = int_to_ptr.vmem [resolvable:$true] %s2156
      %s2158 = sshll.u32 %s14, 4
      %s2159 = int_to_ptr.hbm [resolvable:$true] %s2158
      %2161 = dma.vmem_to_hbm [thread:$0]  %s2157, 512, %s2159, [#allocation8]
    $region93: #{attention_decoder_forward.1} parent=1 // pred_fallthru
      _
    // Predicated region
    $region94: #{attention_decoder_forward.1} parent=1 // pred_check
      _
    $region95: #{attention_decoder_forward.1} parent=1 // pred_check_branch
      %2163 = sbr.rel (0) target = $region97
    $region96: #{attention_decoder_forward.1} parent=1 // pred_region
      _
    $region97: #{attention_decoder_forward.1} parent=1 // pred_fallthru
      _
    // Predicated region
    $region98: #{attention_decoder_forward.1} parent=1 // pred_check
      _
    $region99: #{attention_decoder_forward.1} parent=1 // pred_check_branch
      %2165 = sbr.rel (0) target = $region101
    $region100: #{attention_decoder_forward.1} parent=1 // pred_region
      _
    $region101: #{attention_decoder_forward.1} parent=1 // pred_fallthru
      _
    // Predicated region
    $region102: #{attention_decoder_forward.1} parent=1 // pred_check
      _
    $region103: #{attention_decoder_forward.1} parent=1 // pred_check_branch
      %2167 = sbr.rel (0) target = $region105
    $region104: #{attention_decoder_forward.1} parent=1 // pred_region
      %2169 = vsyncadd [#allocation19], 0
      %s2171 = sshll.u32 [#allocation18], 4
      %s2172 = int_to_ptr.vmem [resolvable:$true] %s2171
      %s2173 = sshll.u32 %s17, 4
      %s2174 = int_to_ptr.hbm [resolvable:$true] %s2173
      %2176 = dma.vmem_to_hbm [thread:$0]  %s2172, 128, %s2174, [#allocation19]
    $region105: #{attention_decoder_forward.1} parent=1 // pred_fallthru
      _
    // Predicated region
    $region106: #{attention_decoder_forward.1} parent=1 // pred_check
      _
    $region107: #{attention_decoder_forward.1} parent=1 // pred_check_branch
      %2178 = sbr.rel (0) target = $region109
    $region108: #{attention_decoder_forward.1} parent=1 // pred_region
      %2180 = dma.done [#allocation8], 512
    $region109: #{attention_decoder_forward.1} parent=1 // pred_fallthru
      _
    // Predicated region
    $region110: #{attention_decoder_forward.1} parent=1 // pred_check
      _
    $region111: #{attention_decoder_forward.1} parent=1 // pred_check_branch
      %2182 = sbr.rel (0) target = $region113
    $region112: #{attention_decoder_forward.1} parent=1 // pred_region
      _
    $region113: #{attention_decoder_forward.1} parent=1 // pred_fallthru
      _
    // Predicated region
    $region114: #{attention_decoder_forward.1} parent=1 // pred_check
      _
    $region115: #{attention_decoder_forward.1} parent=1 // pred_check_branch
      %2184 = sbr.rel (0) target = $region117
    $region116: #{attention_decoder_forward.1} parent=1 // pred_region
      _
    $region117: #{attention_decoder_forward.1} parent=1 // pred_fallthru
      _
    // Predicated region
    $region118: #{attention_decoder_forward.1} parent=1 // pred_check
      _
    $region119: #{attention_decoder_forward.1} parent=1 // pred_check_branch
      %2186 = sbr.rel (0) target = $region121
    $region120: #{attention_decoder_forward.1} parent=1 // pred_region
      %2188 = dma.done [#allocation19], 128
    $region121: #{attention_decoder_forward.1} parent=1 // pred_fallthru
      _
    %2189 = vsyncpa [#allocation7], 1
    %2190 = vsyncpa [#allocation10], 1
    %2191 = vsyncpa [#allocation13], 1
    %2192 = vsyncpa [#allocation16], 1
    %2193 = vsyncpa [#allocation8], 1
    %2194 = vsyncpa [#allocation19], 1

</llo_original>
